<compile_context>
chip_gen: v6e
topology: v6e:2x2x1
jax: 0.10.0
libtpu: 0.0.40
codegen_flags: <defaults>
</compile_context>

<pallas_src>
import jax
import jax.numpy as jnp
from jax import lax
from jax.experimental import pallas as pl
from jax.experimental.pallas import tpu as pltpu


def _round_up(x, m):
    return (x + m - 1) // m * m


def bn_gru_kernel(x_ref, wih_ref, whh_ref, bi_ref, bhn_ref, out_ref, gi_ref):
    """x_ref: (T*B, F) f32 time-major input (BN pre-folded into wih/bi),
       wih_ref: (F, 3H) scaled input weights, whh_ref: (H, 3H) hidden weights,
       bi_ref: (1, 3H) folded bias, bhn_ref: (1, H) b_hn,
       out_ref: (T, B, H) f32, gi_ref: VMEM scratch (T, B, 3H).
       B is a sublane multiple (8), H a lane multiple (128); gate blocks are [r|z|n]."""
    T, B, H = out_ref.shape
    w_dtype = wih_ref.dtype

    # ---- hoisted input projection: one big MXU matmul for all timesteps ----
    gi_all = jnp.dot(x_ref[...].astype(w_dtype), wih_ref[...],
                     preferred_element_type=jnp.float32) + bi_ref[...]
    gi_ref[...] = gi_all.reshape(T, B, 3 * H)

    whh = whh_ref[...]
    bhn = jnp.broadcast_to(bhn_ref[...], (B, H))      # loop-invariant; broadcast hoisted

    def step(t, h):
        gi = gi_ref[t]                                                    # (B, 3H), lane-aligned
        gh = jnp.dot(h.astype(w_dtype), whh,
                     preferred_element_type=jnp.float32)                  # (B, 3H)
        r = jax.nn.sigmoid(gi[:, 0:H] + gh[:, 0:H])
        z = jax.nn.sigmoid(gi[:, H:2 * H] + gh[:, H:2 * H])
        n = jnp.tanh(gi[:, 2 * H:] + r * (gh[:, 2 * H:] + bhn))
        h_new = (1.0 - z) * n + z * h
        out_ref[t] = h_new                                                # full unmasked store
        return h_new

    lax.fori_loop(0, T, step, jnp.zeros((B, H), jnp.float32),
                  unroll=min(T, 8))


def bn_gru_forward(inputs, params, *, hidden_dim, eps=1e-5, matmul_dtype=jnp.float32):
    """inputs: (B, 1, T, F) NCHW like the PyTorch module. Returns (B, 1, T, H)."""
    B, C, T, F = inputs.shape
    assert C == 1, "BN_GRU squeezes a single channel"
    H = hidden_dim
    H_pad = _round_up(H, 128)          # lane-tile aligned gate blocks / output stores
    B_pad = _round_up(B, 8)            # sublane-tile aligned rows

    x = inputs[:, 0].astype(jnp.float32)                       # (B, T, F)

    # ---- BatchNorm2d(1) training-mode batch statistics (cheap XLA reduce, full B*T*F) ----
    mean = jnp.mean(x)
    var = jnp.mean((x - mean) ** 2)                            # biased variance (PyTorch fwd)
    inv_std = lax.rsqrt(var + eps)
    a = inv_std * params["bn_gamma"][0]                        # xn = a * x + c
    c = params["bn_beta"][0] - mean * a

    # ---- fold BN + biases into the input projection; pad each gate block to H_pad ----
    wih, whh = params["weight_ih"], params["weight_hh"]        # (3H, F), (3H, H), gates [r,z,n]
    bih, bhh = params["bias_ih"], params["bias_hh"]

    def gate(w, g):
        return w[g * H:(g + 1) * H]

    wih_blocks, whh_blocks, bi_blocks = [], [], []
    for g in range(3):
        w_i = gate(wih, g)                                     # (H, F)
        w_h = gate(whh, g)                                     # (H, H)
        # xn @ w_i^T = a*(x @ w_i^T) + c*rowsum(w_i)
        wih_blocks.append(jnp.pad((a * w_i).T, ((0, 0), (0, H_pad - H))))        # (F, H_pad)
        whh_blocks.append(jnp.pad(w_h.T, ((0, H_pad - H), (0, H_pad - H))))      # (H_pad, H_pad)
        b = gate(bih, g) + c * jnp.sum(w_i, axis=1)
        if g < 2:                                              # r, z: hidden bias folds straight in
            b = b + gate(bhh, g)
        bi_blocks.append(jnp.pad(b, (0, H_pad - H)))

    wih_k = jnp.concatenate(wih_blocks, axis=1).astype(matmul_dtype)   # (F, 3*H_pad)
    whh_k = jnp.concatenate(whh_blocks, axis=1).astype(matmul_dtype)   # (H_pad, 3*H_pad)
    bi_k = jnp.concatenate(bi_blocks).reshape(1, 3 * H_pad)
    bhn_k = jnp.pad(gate(bhh, 2), (0, H_pad - H)).reshape(1, H_pad)

    # ---- time-major, batch padded to a sublane multiple, flattened for the hoisted matmul ----
    x_tbf = jnp.transpose(x, (1, 0, 2))                                 # (T, B, F)
    x_tbf = jnp.pad(x_tbf, ((0, 0), (0, B_pad - B), (0, 0)))
    x_k = x_tbf.reshape(T * B_pad, F)

    # Size the scoped VMEM limit to the resident footprint with headroom.
    n_f32 = (x_k.size + wih_k.size + whh_k.size + bi_k.size + bhn_k.size
             + T * B_pad * H_pad + T * B_pad * 3 * H_pad)
    vmem_limit = int(min(64 * 1024 * 1024, max(8 * 1024 * 1024, 8 * n_f32)))

    vmem_spec = pl.BlockSpec(memory_space=pltpu.MemorySpace.VMEM)

    out_tbh = pl.pallas_call(
        bn_gru_kernel,
        out_shape=jax.ShapeDtypeStruct((T, B_pad, H_pad), jnp.float32),
        in_specs=[vmem_spec] * 5,
        out_specs=vmem_spec,
        scratch_shapes=[pltpu.VMEM((T, B_pad, 3 * H_pad), jnp.float32)],
        compiler_params=pltpu.CompilerParams(vmem_limit_bytes=vmem_limit),
    )(x_k, wih_k, whh_k, bi_k, bhn_k)

    out = jnp.transpose(out_tbh[:, :B, :H], (1, 0, 2))[:, None, :, :]   # (B, 1, T, H)
    return out


def bn_gru_reference(inputs, params, *, hidden_dim, eps=1e-5):
    """Pure-JAX reference with identical math for a correctness check."""
    H = hidden_dim
    x = inputs[:, 0].astype(jnp.float32)                       # (B, T, F)
    mean = jnp.mean(x)
    var = jnp.mean((x - mean) ** 2)
    xn = (x - mean) * lax.rsqrt(var + eps) * params["bn_gamma"] + params["bn_beta"]

    wih_t = params["weight_ih"].T
    whh_t = params["weight_hh"].T
    bih = params["bias_ih"]
    bhh = params["bias_hh"]
    B, T, _ = xn.shape

    def step(h, x_t):
        gi = x_t @ wih_t + bih
        gh = h @ whh_t + bhh
        r = jax.nn.sigmoid(gi[:, 0:H] + gh[:, 0:H])
        z = jax.nn.sigmoid(gi[:, H:2 * H] + gh[:, H:2 * H])
        n = jnp.tanh(gi[:, 2 * H:3 * H] + r * gh[:, 2 * H:3 * H])
        h_new = (1.0 - z) * n + z * h
        return h_new, h_new

    _, outs = lax.scan(step, jnp.zeros((B, H), jnp.float32),
                       jnp.transpose(xn, (1, 0, 2)))
    return jnp.transpose(outs, (1, 0, 2))[:, None, :, :]


def init_params(key, input_dim, hidden_dim):
    """Deterministic params matching BN_GRU.__init__ / init_weights shapes & scheme."""
    k_ih, k_hh = jax.random.split(key)
    weight_ih = jax.nn.initializers.glorot_uniform()(k_ih, (3 * hidden_dim, input_dim),
                                                     jnp.float32)
    weight_hh = jax.nn.initializers.orthogonal()(k_hh, (3 * hidden_dim, hidden_dim),
                                                 jnp.float32)
    bias_ih = jnp.zeros((3 * hidden_dim,), jnp.float32)
    bias_hh = jnp.zeros((3 * hidden_dim,), jnp.float32)
    bn_gamma = jnp.ones((1,), jnp.float32)
    bn_beta = jnp.zeros((1,), jnp.float32)
    return dict(weight_ih=weight_ih, weight_hh=weight_hh,
                bias_ih=bias_ih, bias_hh=bias_hh,
                bn_gamma=bn_gamma, bn_beta=bn_beta)


if __name__ == "__main__":
    B, T, F, H = 2, 8, 16, 32          # batch, seq-len, input_dim, hidden_dim

    key = jax.random.PRNGKey(0)
    k_params, k_x = jax.random.split(key)
    params = init_params(k_params, input_dim=F, hidden_dim=H)
    x = jax.random.normal(k_x, (B, 1, T, F), dtype=jnp.float32)   # NCHW, C=1

    out = bn_gru_forward(x, params, hidden_dim=H)
    out = jax.block_until_ready(out)

    ref = bn_gru_reference(x, params, hidden_dim=H)
    assert out.shape == (B, 1, T, H)
    assert jnp.allclose(out, ref, atol=2e-3, rtol=2e-3), "Pallas kernel mismatch vs reference"

    print("KERNEL_OK")
</pallas_src>

<mosaic_0001>
module attributes {stable_mosaic.version = 11 : i64} {
  func.func @bn_gru_kernel(%arg0: memref<64x16xf32, #tpu.memory_space<vmem>>, %arg1: memref<16x384xf32, #tpu.memory_space<vmem>>, %arg2: memref<128x384xf32, #tpu.memory_space<vmem>>, %arg3: memref<1x384xf32, #tpu.memory_space<vmem>>, %arg4: memref<1x128xf32, #tpu.memory_space<vmem>>, %arg5: memref<8x8x128xf32, #tpu.memory_space<vmem>>, %arg6: memref<8x8x384xf32, #tpu.memory_space<vmem>>) attributes {dimension_semantics = [], scalar_prefetch = 0 : i64, scratch_operands = 1 : i64, tpu.core_type = #tpu.core_type<tc>} {
    %c0 = arith.constant 0 : index
    %c0_0 = arith.constant 0 : index
    %0 = vector.load %arg0[%c0, %c0_0] : memref<64x16xf32, #tpu.memory_space<vmem>>, vector<64x16xf32>
    %c0_1 = arith.constant 0 : index
    %c0_2 = arith.constant 0 : index
    %1 = vector.load %arg1[%c0_1, %c0_2] : memref<16x384xf32, #tpu.memory_space<vmem>>, vector<16x384xf32>
    %cst = arith.constant dense<0.000000e+00> : vector<64x384xf32>
    %2 = tpu.matmul %0, %1, %cst {dimension_numbers = #tpu.dot_dimension_numbers<[1], [0], [0], [1], [0, 0, 1, 1], [], []>} : vector<64x16xf32>, vector<16x384xf32>, vector<64x384xf32> -> vector<64x384xf32>
    %c0_3 = arith.constant 0 : index
    %c0_4 = arith.constant 0 : index
    %3 = vector.load %arg3[%c0_3, %c0_4] : memref<1x384xf32, #tpu.memory_space<vmem>>, vector<1x384xf32>
    %4 = vector.broadcast %3 : vector<1x384xf32> to vector<64x384xf32>
    %5 = arith.addf %2, %4 : vector<64x384xf32>
    %6 = vector.shape_cast %5 : vector<64x384xf32> to vector<8x8x384xf32>
    %c0_5 = arith.constant 0 : index
    %c0_6 = arith.constant 0 : index
    %c0_7 = arith.constant 0 : index
    %7 = vector.load %arg6[%c0_5, %c0_6, %c0_7] : memref<8x8x384xf32, #tpu.memory_space<vmem>>, vector<8x8x384xf32>
    tpu.vector_store %arg6[%c0_5, %c0_6, %c0_7], %6 {strides = array<i32>} : memref<8x8x384xf32, #tpu.memory_space<vmem>>, vector<8x8x384xf32>,
    %c0_8 = arith.constant 0 : index
    %c0_9 = arith.constant 0 : index
    %8 = vector.load %arg2[%c0_8, %c0_9] : memref<128x384xf32, #tpu.memory_space<vmem>>, vector<128x384xf32>
    %c0_10 = arith.constant 0 : index
    %c0_11 = arith.constant 0 : index
    %9 = vector.load %arg4[%c0_10, %c0_11] : memref<1x128xf32, #tpu.memory_space<vmem>>, vector<1x128xf32>
    %10 = vector.shape_cast %9 : vector<1x128xf32> to vector<1x128xf32>
    %11 = vector.broadcast %10 : vector<1x128xf32> to vector<8x128xf32>
    %cst_12 = arith.constant 0.000000e+00 : f32
    %12 = vector.broadcast %cst_12 : f32 to vector<8x128xf32>
    %c0_i32 = arith.constant 0 : i32
    %13 = arith.index_cast %c0_i32 : i32 to index
    %c0_13 = arith.constant 0 : index
    %c0_14 = arith.constant 0 : index
    %14 = vector.load %arg6[%13, %c0_13, %c0_14] : memref<8x8x384xf32, #tpu.memory_space<vmem>>, vector<1x8x384xf32>
    %15 = vector.shape_cast %14 : vector<1x8x384xf32> to vector<8x384xf32>
    %cst_15 = arith.constant dense<0.000000e+00> : vector<8x384xf32>
    %16 = tpu.matmul %12, %8, %cst_15 {dimension_numbers = #tpu.dot_dimension_numbers<[1], [0], [0], [1], [0, 0, 1, 1], [], []>} : vector<8x128xf32>, vector<128x384xf32>, vector<8x384xf32> -> vector<8x384xf32>
    %17 = vector.extract_strided_slice %15 {offsets = [0, 0], sizes = [8, 128], strides = [1, 1]} : vector<8x384xf32> to vector<8x128xf32>
    %18 = vector.extract_strided_slice %16 {offsets = [0, 0], sizes = [8, 128], strides = [1, 1]} : vector<8x384xf32> to vector<8x128xf32>
    %19 = arith.addf %17, %18 : vector<8x128xf32>
    %20 = arith.negf %19 : vector<8x128xf32>
    %21 = math.exp %20 : vector<8x128xf32>
    %cst_16 = arith.constant 1.000000e+00 : f32
    %22 = vector.broadcast %cst_16 : f32 to vector<8x128xf32>
    %23 = arith.addf %22, %21 : vector<8x128xf32>
    %24 = arith.divf %22, %23 : vector<8x128xf32>
    %25 = vector.extract_strided_slice %15 {offsets = [0, 128], sizes = [8, 128], strides = [1, 1]} : vector<8x384xf32> to vector<8x128xf32>
    %26 = vector.extract_strided_slice %16 {offsets = [0, 128], sizes = [8, 128], strides = [1, 1]} : vector<8x384xf32> to vector<8x128xf32>
    %27 = arith.addf %25, %26 : vector<8x128xf32>
    %28 = arith.negf %27 : vector<8x128xf32>
    %29 = math.exp %28 : vector<8x128xf32>
    %cst_17 = arith.constant 1.000000e+00 : f32
    %30 = vector.broadcast %cst_17 : f32 to vector<8x128xf32>
    %31 = arith.addf %30, %29 : vector<8x128xf32>
    %32 = arith.divf %30, %31 : vector<8x128xf32>
    %33 = vector.extract_strided_slice %15 {offsets = [0, 256], sizes = [8, 128], strides = [1, 1]} : vector<8x384xf32> to vector<8x128xf32>
    %34 = vector.extract_strided_slice %16 {offsets = [0, 256], sizes = [8, 128], strides = [1, 1]} : vector<8x384xf32> to vector<8x128xf32>
    %35 = arith.addf %34, %11 : vector<8x128xf32>
    %36 = arith.mulf %24, %35 : vector<8x128xf32>
    %37 = arith.addf %33, %36 : vector<8x128xf32>
    %38 = math.tanh %37 : vector<8x128xf32>
    %cst_18 = arith.constant 1.000000e+00 : f32
    %39 = vector.broadcast %cst_18 : f32 to vector<8x128xf32>
    %40 = arith.subf %39, %32 : vector<8x128xf32>
    %41 = arith.mulf %40, %38 : vector<8x128xf32>
    %42 = arith.mulf %32, %12 : vector<8x128xf32>
    %43 = arith.addf %41, %42 : vector<8x128xf32>
    %44 = arith.index_cast %c0_i32 : i32 to index
    %c0_19 = arith.constant 0 : index
    %c0_20 = arith.constant 0 : index
    %45 = vector.load %arg5[%44, %c0_19, %c0_20] : memref<8x8x128xf32, #tpu.memory_space<vmem>>, vector<1x8x128xf32>
    %46 = vector.shape_cast %45 : vector<1x8x128xf32> to vector<8x128xf32>
    %47 = vector.shape_cast %43 : vector<8x128xf32> to vector<1x8x128xf32>
    tpu.vector_store %arg5[%44, %c0_19, %c0_20], %47 {strides = array<i32>} : memref<8x8x128xf32, #tpu.memory_space<vmem>>, vector<1x8x128xf32>,
    %c1_i32 = arith.constant 1 : i32
    %48 = arith.index_cast %c1_i32 : i32 to index
    %c0_21 = arith.constant 0 : index
    %c0_22 = arith.constant 0 : index
    %49 = vector.load %arg6[%48, %c0_21, %c0_22] : memref<8x8x384xf32, #tpu.memory_space<vmem>>, vector<1x8x384xf32>
    %50 = vector.shape_cast %49 : vector<1x8x384xf32> to vector<8x384xf32>
    %cst_23 = arith.constant dense<0.000000e+00> : vector<8x384xf32>
    %51 = tpu.matmul %43, %8, %cst_23 {dimension_numbers = #tpu.dot_dimension_numbers<[1], [0], [0], [1], [0, 0, 1, 1], [], []>} : vector<8x128xf32>, vector<128x384xf32>, vector<8x384xf32> -> vector<8x384xf32>
    %52 = vector.extract_strided_slice %50 {offsets = [0, 0], sizes = [8, 128], strides = [1, 1]} : vector<8x384xf32> to vector<8x128xf32>
    %53 = vector.extract_strided_slice %51 {offsets = [0, 0], sizes = [8, 128], strides = [1, 1]} : vector<8x384xf32> to vector<8x128xf32>
    %54 = arith.addf %52, %53 : vector<8x128xf32>
    %55 = arith.negf %54 : vector<8x128xf32>
    %56 = math.exp %55 : vector<8x128xf32>
    %cst_24 = arith.constant 1.000000e+00 : f32
    %57 = vector.broadcast %cst_24 : f32 to vector<8x128xf32>
    %58 = arith.addf %57, %56 : vector<8x128xf32>
    %59 = arith.divf %57, %58 : vector<8x128xf32>
    %60 = vector.extract_strided_slice %50 {offsets = [0, 128], sizes = [8, 128], strides = [1, 1]} : vector<8x384xf32> to vector<8x128xf32>
    %61 = vector.extract_strided_slice %51 {offsets = [0, 128], sizes = [8, 128], strides = [1, 1]} : vector<8x384xf32> to vector<8x128xf32>
    %62 = arith.addf %60, %61 : vector<8x128xf32>
    %63 = arith.negf %62 : vector<8x128xf32>
    %64 = math.exp %63 : vector<8x128xf32>
    %cst_25 = arith.constant 1.000000e+00 : f32
    %65 = vector.broadcast %cst_25 : f32 to vector<8x128xf32>
    %66 = arith.addf %65, %64 : vector<8x128xf32>
    %67 = arith.divf %65, %66 : vector<8x128xf32>
    %68 = vector.extract_strided_slice %50 {offsets = [0, 256], sizes = [8, 128], strides = [1, 1]} : vector<8x384xf32> to vector<8x128xf32>
    %69 = vector.extract_strided_slice %51 {offsets = [0, 256], sizes = [8, 128], strides = [1, 1]} : vector<8x384xf32> to vector<8x128xf32>
    %70 = arith.addf %69, %11 : vector<8x128xf32>
    %71 = arith.mulf %59, %70 : vector<8x128xf32>
    %72 = arith.addf %68, %71 : vector<8x128xf32>
    %73 = math.tanh %72 : vector<8x128xf32>
    %cst_26 = arith.constant 1.000000e+00 : f32
    %74 = vector.broadcast %cst_26 : f32 to vector<8x128xf32>
    %75 = arith.subf %74, %67 : vector<8x128xf32>
    %76 = arith.mulf %75, %73 : vector<8x128xf32>
    %77 = arith.mulf %67, %43 : vector<8x128xf32>
    %78 = arith.addf %76, %77 : vector<8x128xf32>
    %79 = arith.index_cast %c1_i32 : i32 to index
    %c0_27 = arith.constant 0 : index
    %c0_28 = arith.constant 0 : index
    %80 = vector.load %arg5[%79, %c0_27, %c0_28] : memref<8x8x128xf32, #tpu.memory_space<vmem>>, vector<1x8x128xf32>
    %81 = vector.shape_cast %80 : vector<1x8x128xf32> to vector<8x128xf32>
    %82 = vector.shape_cast %78 : vector<8x128xf32> to vector<1x8x128xf32>
    tpu.vector_store %arg5[%79, %c0_27, %c0_28], %82 {strides = array<i32>} : memref<8x8x128xf32, #tpu.memory_space<vmem>>, vector<1x8x128xf32>,
    %c2_i32 = arith.constant 2 : i32
    %83 = arith.index_cast %c2_i32 : i32 to index
    %c0_29 = arith.constant 0 : index
    %c0_30 = arith.constant 0 : index
    %84 = vector.load %arg6[%83, %c0_29, %c0_30] : memref<8x8x384xf32, #tpu.memory_space<vmem>>, vector<1x8x384xf32>
    %85 = vector.shape_cast %84 : vector<1x8x384xf32> to vector<8x384xf32>
    %cst_31 = arith.constant dense<0.000000e+00> : vector<8x384xf32>
    %86 = tpu.matmul %78, %8, %cst_31 {dimension_numbers = #tpu.dot_dimension_numbers<[1], [0], [0], [1], [0, 0, 1, 1], [], []>} : vector<8x128xf32>, vector<128x384xf32>, vector<8x384xf32> -> vector<8x384xf32>
    %87 = vector.extract_strided_slice %85 {offsets = [0, 0], sizes = [8, 128], strides = [1, 1]} : vector<8x384xf32> to vector<8x128xf32>
    %88 = vector.extract_strided_slice %86 {offsets = [0, 0], sizes = [8, 128], strides = [1, 1]} : vector<8x384xf32> to vector<8x128xf32>
    %89 = arith.addf %87, %88 : vector<8x128xf32>
    %90 = arith.negf %89 : vector<8x128xf32>
    %91 = math.exp %90 : vector<8x128xf32>
    %cst_32 = arith.constant 1.000000e+00 : f32
    %92 = vector.broadcast %cst_32 : f32 to vector<8x128xf32>
    %93 = arith.addf %92, %91 : vector<8x128xf32>
    %94 = arith.divf %92, %93 : vector<8x128xf32>
    %95 = vector.extract_strided_slice %85 {offsets = [0, 128], sizes = [8, 128], strides = [1, 1]} : vector<8x384xf32> to vector<8x128xf32>
    %96 = vector.extract_strided_slice %86 {offsets = [0, 128], sizes = [8, 128], strides = [1, 1]} : vector<8x384xf32> to vector<8x128xf32>
    %97 = arith.addf %95, %96 : vector<8x128xf32>
    %98 = arith.negf %97 : vector<8x128xf32>
    %99 = math.exp %98 : vector<8x128xf32>
    %cst_33 = arith.constant 1.000000e+00 : f32
    %100 = vector.broadcast %cst_33 : f32 to vector<8x128xf32>
    %101 = arith.addf %100, %99 : vector<8x128xf32>
    %102 = arith.divf %100, %101 : vector<8x128xf32>
    %103 = vector.extract_strided_slice %85 {offsets = [0, 256], sizes = [8, 128], strides = [1, 1]} : vector<8x384xf32> to vector<8x128xf32>
    %104 = vector.extract_strided_slice %86 {offsets = [0, 256], sizes = [8, 128], strides = [1, 1]} : vector<8x384xf32> to vector<8x128xf32>
    %105 = arith.addf %104, %11 : vector<8x128xf32>
    %106 = arith.mulf %94, %105 : vector<8x128xf32>
    %107 = arith.addf %103, %106 : vector<8x128xf32>
    %108 = math.tanh %107 : vector<8x128xf32>
    %cst_34 = arith.constant 1.000000e+00 : f32
    %109 = vector.broadcast %cst_34 : f32 to vector<8x128xf32>
    %110 = arith.subf %109, %102 : vector<8x128xf32>
    %111 = arith.mulf %110, %108 : vector<8x128xf32>
    %112 = arith.mulf %102, %78 : vector<8x128xf32>
    %113 = arith.addf %111, %112 : vector<8x128xf32>
    %114 = arith.index_cast %c2_i32 : i32 to index
    %c0_35 = arith.constant 0 : index
    %c0_36 = arith.constant 0 : index
    %115 = vector.load %arg5[%114, %c0_35, %c0_36] : memref<8x8x128xf32, #tpu.memory_space<vmem>>, vector<1x8x128xf32>
    %116 = vector.shape_cast %115 : vector<1x8x128xf32> to vector<8x128xf32>
    %117 = vector.shape_cast %113 : vector<8x128xf32> to vector<1x8x128xf32>
    tpu.vector_store %arg5[%114, %c0_35, %c0_36], %117 {strides = array<i32>} : memref<8x8x128xf32, #tpu.memory_space<vmem>>, vector<1x8x128xf32>,
    %c3_i32 = arith.constant 3 : i32
    %118 = arith.index_cast %c3_i32 : i32 to index
    %c0_37 = arith.constant 0 : index
    %c0_38 = arith.constant 0 : index
    %119 = vector.load %arg6[%118, %c0_37, %c0_38] : memref<8x8x384xf32, #tpu.memory_space<vmem>>, vector<1x8x384xf32>
    %120 = vector.shape_cast %119 : vector<1x8x384xf32> to vector<8x384xf32>
    %cst_39 = arith.constant dense<0.000000e+00> : vector<8x384xf32>
    %121 = tpu.matmul %113, %8, %cst_39 {dimension_numbers = #tpu.dot_dimension_numbers<[1], [0], [0], [1], [0, 0, 1, 1], [], []>} : vector<8x128xf32>, vector<128x384xf32>, vector<8x384xf32> -> vector<8x384xf32>
    %122 = vector.extract_strided_slice %120 {offsets = [0, 0], sizes = [8, 128], strides = [1, 1]} : vector<8x384xf32> to vector<8x128xf32>
    %123 = vector.extract_strided_slice %121 {offsets = [0, 0], sizes = [8, 128], strides = [1, 1]} : vector<8x384xf32> to vector<8x128xf32>
    %124 = arith.addf %122, %123 : vector<8x128xf32>
    %125 = arith.negf %124 : vector<8x128xf32>
    %126 = math.exp %125 : vector<8x128xf32>
    %cst_40 = arith.constant 1.000000e+00 : f32
    %127 = vector.broadcast %cst_40 : f32 to vector<8x128xf32>
    %128 = arith.addf %127, %126 : vector<8x128xf32>
    %129 = arith.divf %127, %128 : vector<8x128xf32>
    %130 = vector.extract_strided_slice %120 {offsets = [0, 128], sizes = [8, 128], strides = [1, 1]} : vector<8x384xf32> to vector<8x128xf32>
    %131 = vector.extract_strided_slice %121 {offsets = [0, 128], sizes = [8, 128], strides = [1, 1]} : vector<8x384xf32> to vector<8x128xf32>
    %132 = arith.addf %130, %131 : vector<8x128xf32>
    %133 = arith.negf %132 : vector<8x128xf32>
    %134 = math.exp %133 : vector<8x128xf32>
    %cst_41 = arith.constant 1.000000e+00 : f32
    %135 = vector.broadcast %cst_41 : f32 to vector<8x128xf32>
    %136 = arith.addf %135, %134 : vector<8x128xf32>
    %137 = arith.divf %135, %136 : vector<8x128xf32>
    %138 = vector.extract_strided_slice %120 {offsets = [0, 256], sizes = [8, 128], strides = [1, 1]} : vector<8x384xf32> to vector<8x128xf32>
    %139 = vector.extract_strided_slice %121 {offsets = [0, 256], sizes = [8, 128], strides = [1, 1]} : vector<8x384xf32> to vector<8x128xf32>
    %140 = arith.addf %139, %11 : vector<8x128xf32>
    %141 = arith.mulf %129, %140 : vector<8x128xf32>
    %142 = arith.addf %138, %141 : vector<8x128xf32>
    %143 = math.tanh %142 : vector<8x128xf32>
    %cst_42 = arith.constant 1.000000e+00 : f32
    %144 = vector.broadcast %cst_42 : f32 to vector<8x128xf32>
    %145 = arith.subf %144, %137 : vector<8x128xf32>
    %146 = arith.mulf %145, %143 : vector<8x128xf32>
    %147 = arith.mulf %137, %113 : vector<8x128xf32>
    %148 = arith.addf %146, %147 : vector<8x128xf32>
    %149 = arith.index_cast %c3_i32 : i32 to index
    %c0_43 = arith.constant 0 : index
    %c0_44 = arith.constant 0 : index
    %150 = vector.load %arg5[%149, %c0_43, %c0_44] : memref<8x8x128xf32, #tpu.memory_space<vmem>>, vector<1x8x128xf32>
    %151 = vector.shape_cast %150 : vector<1x8x128xf32> to vector<8x128xf32>
    %152 = vector.shape_cast %148 : vector<8x128xf32> to vector<1x8x128xf32>
    tpu.vector_store %arg5[%149, %c0_43, %c0_44], %152 {strides = array<i32>} : memref<8x8x128xf32, #tpu.memory_space<vmem>>, vector<1x8x128xf32>,
    %c4_i32 = arith.constant 4 : i32
    %153 = arith.index_cast %c4_i32 : i32 to index
    %c0_45 = arith.constant 0 : index
    %c0_46 = arith.constant 0 : index
    %154 = vector.load %arg6[%153, %c0_45, %c0_46] : memref<8x8x384xf32, #tpu.memory_space<vmem>>, vector<1x8x384xf32>
    %155 = vector.shape_cast %154 : vector<1x8x384xf32> to vector<8x384xf32>
    %cst_47 = arith.constant dense<0.000000e+00> : vector<8x384xf32>
    %156 = tpu.matmul %148, %8, %cst_47 {dimension_numbers = #tpu.dot_dimension_numbers<[1], [0], [0], [1], [0, 0, 1, 1], [], []>} : vector<8x128xf32>, vector<128x384xf32>, vector<8x384xf32> -> vector<8x384xf32>
    %157 = vector.extract_strided_slice %155 {offsets = [0, 0], sizes = [8, 128], strides = [1, 1]} : vector<8x384xf32> to vector<8x128xf32>
    %158 = vector.extract_strided_slice %156 {offsets = [0, 0], sizes = [8, 128], strides = [1, 1]} : vector<8x384xf32> to vector<8x128xf32>
    %159 = arith.addf %157, %158 : vector<8x128xf32>
    %160 = arith.negf %159 : vector<8x128xf32>
    %161 = math.exp %160 : vector<8x128xf32>
    %cst_48 = arith.constant 1.000000e+00 : f32
    %162 = vector.broadcast %cst_48 : f32 to vector<8x128xf32>
    %163 = arith.addf %162, %161 : vector<8x128xf32>
    %164 = arith.divf %162, %163 : vector<8x128xf32>
    %165 = vector.extract_strided_slice %155 {offsets = [0, 128], sizes = [8, 128], strides = [1, 1]} : vector<8x384xf32> to vector<8x128xf32>
    %166 = vector.extract_strided_slice %156 {offsets = [0, 128], sizes = [8, 128], strides = [1, 1]} : vector<8x384xf32> to vector<8x128xf32>
    %167 = arith.addf %165, %166 : vector<8x128xf32>
    %168 = arith.negf %167 : vector<8x128xf32>
    %169 = math.exp %168 : vector<8x128xf32>
    %cst_49 = arith.constant 1.000000e+00 : f32
    %170 = vector.broadcast %cst_49 : f32 to vector<8x128xf32>
    %171 = arith.addf %170, %169 : vector<8x128xf32>
    %172 = arith.divf %170, %171 : vector<8x128xf32>
    %173 = vector.extract_strided_slice %155 {offsets = [0, 256], sizes = [8, 128], strides = [1, 1]} : vector<8x384xf32> to vector<8x128xf32>
    %174 = vector.extract_strided_slice %156 {offsets = [0, 256], sizes = [8, 128], strides = [1, 1]} : vector<8x384xf32> to vector<8x128xf32>
    %175 = arith.addf %174, %11 : vector<8x128xf32>
    %176 = arith.mulf %164, %175 : vector<8x128xf32>
    %177 = arith.addf %173, %176 : vector<8x128xf32>
    %178 = math.tanh %177 : vector<8x128xf32>
    %cst_50 = arith.constant 1.000000e+00 : f32
    %179 = vector.broadcast %cst_50 : f32 to vector<8x128xf32>
    %180 = arith.subf %179, %172 : vector<8x128xf32>
    %181 = arith.mulf %180, %178 : vector<8x128xf32>
    %182 = arith.mulf %172, %148 : vector<8x128xf32>
    %183 = arith.addf %181, %182 : vector<8x128xf32>
    %184 = arith.index_cast %c4_i32 : i32 to index
    %c0_51 = arith.constant 0 : index
    %c0_52 = arith.constant 0 : index
    %185 = vector.load %arg5[%184, %c0_51, %c0_52] : memref<8x8x128xf32, #tpu.memory_space<vmem>>, vector<1x8x128xf32>
    %186 = vector.shape_cast %185 : vector<1x8x128xf32> to vector<8x128xf32>
    %187 = vector.shape_cast %183 : vector<8x128xf32> to vector<1x8x128xf32>
    tpu.vector_store %arg5[%184, %c0_51, %c0_52], %187 {strides = array<i32>} : memref<8x8x128xf32, #tpu.memory_space<vmem>>, vector<1x8x128xf32>,
    %c5_i32 = arith.constant 5 : i32
    %188 = arith.index_cast %c5_i32 : i32 to index
    %c0_53 = arith.constant 0 : index
    %c0_54 = arith.constant 0 : index
    %189 = vector.load %arg6[%188, %c0_53, %c0_54] : memref<8x8x384xf32, #tpu.memory_space<vmem>>, vector<1x8x384xf32>
    %190 = vector.shape_cast %189 : vector<1x8x384xf32> to vector<8x384xf32>
    %cst_55 = arith.constant dense<0.000000e+00> : vector<8x384xf32>
    %191 = tpu.matmul %183, %8, %cst_55 {dimension_numbers = #tpu.dot_dimension_numbers<[1], [0], [0], [1], [0, 0, 1, 1], [], []>} : vector<8x128xf32>, vector<128x384xf32>, vector<8x384xf32> -> vector<8x384xf32>
    %192 = vector.extract_strided_slice %190 {offsets = [0, 0], sizes = [8, 128], strides = [1, 1]} : vector<8x384xf32> to vector<8x128xf32>
    %193 = vector.extract_strided_slice %191 {offsets = [0, 0], sizes = [8, 128], strides = [1, 1]} : vector<8x384xf32> to vector<8x128xf32>
    %194 = arith.addf %192, %193 : vector<8x128xf32>
    %195 = arith.negf %194 : vector<8x128xf32>
    %196 = math.exp %195 : vector<8x128xf32>
    %cst_56 = arith.constant 1.000000e+00 : f32
    %197 = vector.broadcast %cst_56 : f32 to vector<8x128xf32>
    %198 = arith.addf %197, %196 : vector<8x128xf32>
    %199 = arith.divf %197, %198 : vector<8x128xf32>
    %200 = vector.extract_strided_slice %190 {offsets = [0, 128], sizes = [8, 128], strides = [1, 1]} : vector<8x384xf32> to vector<8x128xf32>
    %201 = vector.extract_strided_slice %191 {offsets = [0, 128], sizes = [8, 128], strides = [1, 1]} : vector<8x384xf32> to vector<8x128xf32>
    %202 = arith.addf %200, %201 : vector<8x128xf32>
    %203 = arith.negf %202 : vector<8x128xf32>
    %204 = math.exp %203 : vector<8x128xf32>
    %cst_57 = arith.constant 1.000000e+00 : f32
    %205 = vector.broadcast %cst_57 : f32 to vector<8x128xf32>
    %206 = arith.addf %205, %204 : vector<8x128xf32>
    %207 = arith.divf %205, %206 : vector<8x128xf32>
    %208 = vector.extract_strided_slice %190 {offsets = [0, 256], sizes = [8, 128], strides = [1, 1]} : vector<8x384xf32> to vector<8x128xf32>
    %209 = vector.extract_strided_slice %191 {offsets = [0, 256], sizes = [8, 128], strides = [1, 1]} : vector<8x384xf32> to vector<8x128xf32>
    %210 = arith.addf %209, %11 : vector<8x128xf32>
    %211 = arith.mulf %199, %210 : vector<8x128xf32>
    %212 = arith.addf %208, %211 : vector<8x128xf32>
    %213 = math.tanh %212 : vector<8x128xf32>
    %cst_58 = arith.constant 1.000000e+00 : f32
    %214 = vector.broadcast %cst_58 : f32 to vector<8x128xf32>
    %215 = arith.subf %214, %207 : vector<8x128xf32>
    %216 = arith.mulf %215, %213 : vector<8x128xf32>
    %217 = arith.mulf %207, %183 : vector<8x128xf32>
    %218 = arith.addf %216, %217 : vector<8x128xf32>
    %219 = arith.index_cast %c5_i32 : i32 to index
    %c0_59 = arith.constant 0 : index
    %c0_60 = arith.constant 0 : index
    %220 = vector.load %arg5[%219, %c0_59, %c0_60] : memref<8x8x128xf32, #tpu.memory_space<vmem>>, vector<1x8x128xf32>
    %221 = vector.shape_cast %220 : vector<1x8x128xf32> to vector<8x128xf32>
    %222 = vector.shape_cast %218 : vector<8x128xf32> to vector<1x8x128xf32>
    tpu.vector_store %arg5[%219, %c0_59, %c0_60], %222 {strides = array<i32>} : memref<8x8x128xf32, #tpu.memory_space<vmem>>, vector<1x8x128xf32>,
    %c6_i32 = arith.constant 6 : i32
    %223 = arith.index_cast %c6_i32 : i32 to index
    %c0_61 = arith.constant 0 : index
    %c0_62 = arith.constant 0 : index
    %224 = vector.load %arg6[%223, %c0_61, %c0_62] : memref<8x8x384xf32, #tpu.memory_space<vmem>>, vector<1x8x384xf32>
    %225 = vector.shape_cast %224 : vector<1x8x384xf32> to vector<8x384xf32>
    %cst_63 = arith.constant dense<0.000000e+00> : vector<8x384xf32>
    %226 = tpu.matmul %218, %8, %cst_63 {dimension_numbers = #tpu.dot_dimension_numbers<[1], [0], [0], [1], [0, 0, 1, 1], [], []>} : vector<8x128xf32>, vector<128x384xf32>, vector<8x384xf32> -> vector<8x384xf32>
    %227 = vector.extract_strided_slice %225 {offsets = [0, 0], sizes = [8, 128], strides = [1, 1]} : vector<8x384xf32> to vector<8x128xf32>
    %228 = vector.extract_strided_slice %226 {offsets = [0, 0], sizes = [8, 128], strides = [1, 1]} : vector<8x384xf32> to vector<8x128xf32>
    %229 = arith.addf %227, %228 : vector<8x128xf32>
    %230 = arith.negf %229 : vector<8x128xf32>
    %231 = math.exp %230 : vector<8x128xf32>
    %cst_64 = arith.constant 1.000000e+00 : f32
    %232 = vector.broadcast %cst_64 : f32 to vector<8x128xf32>
    %233 = arith.addf %232, %231 : vector<8x128xf32>
    %234 = arith.divf %232, %233 : vector<8x128xf32>
    %235 = vector.extract_strided_slice %225 {offsets = [0, 128], sizes = [8, 128], strides = [1, 1]} : vector<8x384xf32> to vector<8x128xf32>
    %236 = vector.extract_strided_slice %226 {offsets = [0, 128], sizes = [8, 128], strides = [1, 1]} : vector<8x384xf32> to vector<8x128xf32>
    %237 = arith.addf %235, %236 : vector<8x128xf32>
    %238 = arith.negf %237 : vector<8x128xf32>
    %239 = math.exp %238 : vector<8x128xf32>
    %cst_65 = arith.constant 1.000000e+00 : f32
    %240 = vector.broadcast %cst_65 : f32 to vector<8x128xf32>
    %241 = arith.addf %240, %239 : vector<8x128xf32>
    %242 = arith.divf %240, %241 : vector<8x128xf32>
    %243 = vector.extract_strided_slice %225 {offsets = [0, 256], sizes = [8, 128], strides = [1, 1]} : vector<8x384xf32> to vector<8x128xf32>
    %244 = vector.extract_strided_slice %226 {offsets = [0, 256], sizes = [8, 128], strides = [1, 1]} : vector<8x384xf32> to vector<8x128xf32>
    %245 = arith.addf %244, %11 : vector<8x128xf32>
    %246 = arith.mulf %234, %245 : vector<8x128xf32>
    %247 = arith.addf %243, %246 : vector<8x128xf32>
    %248 = math.tanh %247 : vector<8x128xf32>
    %cst_66 = arith.constant 1.000000e+00 : f32
    %249 = vector.broadcast %cst_66 : f32 to vector<8x128xf32>
    %250 = arith.subf %249, %242 : vector<8x128xf32>
    %251 = arith.mulf %250, %248 : vector<8x128xf32>
    %252 = arith.mulf %242, %218 : vector<8x128xf32>
    %253 = arith.addf %251, %252 : vector<8x128xf32>
    %254 = arith.index_cast %c6_i32 : i32 to index
    %c0_67 = arith.constant 0 : index
    %c0_68 = arith.constant 0 : index
    %255 = vector.load %arg5[%254, %c0_67, %c0_68] : memref<8x8x128xf32, #tpu.memory_space<vmem>>, vector<1x8x128xf32>
    %256 = vector.shape_cast %255 : vector<1x8x128xf32> to vector<8x128xf32>
    %257 = vector.shape_cast %253 : vector<8x128xf32> to vector<1x8x128xf32>
    tpu.vector_store %arg5[%254, %c0_67, %c0_68], %257 {strides = array<i32>} : memref<8x8x128xf32, #tpu.memory_space<vmem>>, vector<1x8x128xf32>,
    %c7_i32 = arith.constant 7 : i32
    %258 = arith.index_cast %c7_i32 : i32 to index
    %c0_69 = arith.constant 0 : index
    %c0_70 = arith.constant 0 : index
    %259 = vector.load %arg6[%258, %c0_69, %c0_70] : memref<8x8x384xf32, #tpu.memory_space<vmem>>, vector<1x8x384xf32>
    %260 = vector.shape_cast %259 : vector<1x8x384xf32> to vector<8x384xf32>
    %cst_71 = arith.constant dense<0.000000e+00> : vector<8x384xf32>
    %261 = tpu.matmul %253, %8, %cst_71 {dimension_numbers = #tpu.dot_dimension_numbers<[1], [0], [0], [1], [0, 0, 1, 1], [], []>} : vector<8x128xf32>, vector<128x384xf32>, vector<8x384xf32> -> vector<8x384xf32>
    %262 = vector.extract_strided_slice %260 {offsets = [0, 0], sizes = [8, 128], strides = [1, 1]} : vector<8x384xf32> to vector<8x128xf32>
    %263 = vector.extract_strided_slice %261 {offsets = [0, 0], sizes = [8, 128], strides = [1, 1]} : vector<8x384xf32> to vector<8x128xf32>
    %264 = arith.addf %262, %263 : vector<8x128xf32>
    %265 = arith.negf %264 : vector<8x128xf32>
    %266 = math.exp %265 : vector<8x128xf32>
    %cst_72 = arith.constant 1.000000e+00 : f32
    %267 = vector.broadcast %cst_72 : f32 to vector<8x128xf32>
    %268 = arith.addf %267, %266 : vector<8x128xf32>
    %269 = arith.divf %267, %268 : vector<8x128xf32>
    %270 = vector.extract_strided_slice %260 {offsets = [0, 128], sizes = [8, 128], strides = [1, 1]} : vector<8x384xf32> to vector<8x128xf32>
    %271 = vector.extract_strided_slice %261 {offsets = [0, 128], sizes = [8, 128], strides = [1, 1]} : vector<8x384xf32> to vector<8x128xf32>
    %272 = arith.addf %270, %271 : vector<8x128xf32>
    %273 = arith.negf %272 : vector<8x128xf32>
    %274 = math.exp %273 : vector<8x128xf32>
    %cst_73 = arith.constant 1.000000e+00 : f32
    %275 = vector.broadcast %cst_73 : f32 to vector<8x128xf32>
    %276 = arith.addf %275, %274 : vector<8x128xf32>
    %277 = arith.divf %275, %276 : vector<8x128xf32>
    %278 = vector.extract_strided_slice %260 {offsets = [0, 256], sizes = [8, 128], strides = [1, 1]} : vector<8x384xf32> to vector<8x128xf32>
    %279 = vector.extract_strided_slice %261 {offsets = [0, 256], sizes = [8, 128], strides = [1, 1]} : vector<8x384xf32> to vector<8x128xf32>
    %280 = arith.addf %279, %11 : vector<8x128xf32>
    %281 = arith.mulf %269, %280 : vector<8x128xf32>
    %282 = arith.addf %278, %281 : vector<8x128xf32>
    %283 = math.tanh %282 : vector<8x128xf32>
    %cst_74 = arith.constant 1.000000e+00 : f32
    %284 = vector.broadcast %cst_74 : f32 to vector<8x128xf32>
    %285 = arith.subf %284, %277 : vector<8x128xf32>
    %286 = arith.mulf %285, %283 : vector<8x128xf32>
    %287 = arith.mulf %277, %253 : vector<8x128xf32>
    %288 = arith.addf %286, %287 : vector<8x128xf32>
    %289 = arith.index_cast %c7_i32 : i32 to index
    %c0_75 = arith.constant 0 : index
    %c0_76 = arith.constant 0 : index
    %290 = vector.load %arg5[%289, %c0_75, %c0_76] : memref<8x8x128xf32, #tpu.memory_space<vmem>>, vector<1x8x128xf32>
    %291 = vector.shape_cast %290 : vector<1x8x128xf32> to vector<8x128xf32>
    %292 = vector.shape_cast %288 : vector<8x128xf32> to vector<1x8x128xf32>
    tpu.vector_store %arg5[%289, %c0_75, %c0_76], %292 {strides = array<i32>} : memref<8x8x128xf32, #tpu.memory_space<vmem>>, vector<1x8x128xf32>,
    %c8_i32 = arith.constant 8 : i32
    return
  }
}

</mosaic_0001>

<llo_original>
// kernel: tpu_custom_call.1
$region0: #{tpu_custom_call.1}
  #allocation0 [shape = 'u32[]', space=smem, size = 0x4, offset = 0x4, fixed_abs, tag = 'smem constant byte address 0x4 - core index']
  #allocation1 [shape = 'u32[144,128]{1,0:T(1,128)}', space=vmem, size = 0x12000, scoped, tag = 'internal scratch']
  #allocation2 [shape = 'f32[8,8,384]{2,1,0:T(8,128)}', space=vmem, size = 0x18000, scoped, tag = 'scratch operand']
  %s0 = inlined_call_operand.vmem [shape: f32[64,16], index: 0, kind: input, shape index: {}]
  %s1 = inlined_call_operand.vmem [shape: f32[16,384], index: 1, kind: input, shape index: {}]
  %s2 = inlined_call_operand.hbm [shape: f32[128,384], index: 2, kind: input, shape index: {}]
  %s3 = inlined_call_operand.vmem [shape: f32[1,384], index: 3, kind: input, shape index: {}]
  %s4 = inlined_call_operand.vmem [shape: f32[1,128], index: 4, kind: input, shape index: {}]
  %s5 = inlined_call_operand.hbm [shape: f32[8,8,128], index: 5, kind: output, shape index: {}]
  %s6 = sld [smem:[#allocation0]]
  $region34: #{tpu_custom_call.1} parent=0
    _
  %s8 = ssub.s32 1, %s6
  %s9 = scalar_select 0, %s8, %s6
  $region1: #{tpu_custom_call.1} parent=0
    #allocation3 [shape = 'u8[196608]{0}', space=vmem, size = 0x30000, scoped, tag = 'input window, operand 2, single buffered']
    #allocation4 [shape = 's32[1]{0}', space=sflag, size = 0x4, scoped, tag = 'scoped memory for tpu_custom_call.1']
    #allocation5 [shape = 's32[1]{0}', space=sflag, size = 0x4, scoped, tag = 'scoped memory for tpu_custom_call.1']
    #allocation6 [shape = 'u8[32768]{0}', space=vmem, size = 0x8000, scoped, tag = 'output window, operand 0, single buffered']
    %10 = vsyncpa [#allocation4], 0
    %11 = vsyncpa [#allocation5], 0
    // Predicated region
    $region2: #{tpu_custom_call.1} parent=1 // pred_check
      _
    $region3: #{tpu_custom_call.1} parent=1 // pred_check_branch
      %13 = sbr.rel (0) target = $region5
    $region4: #{tpu_custom_call.1} parent=1 // pred_region
      _
    $region5: #{tpu_custom_call.1} parent=1 // pred_fallthru
      _
    // Predicated region
    $region6: #{tpu_custom_call.1} parent=1 // pred_check
      _
    $region7: #{tpu_custom_call.1} parent=1 // pred_check_branch
      %15 = sbr.rel (0) target = $region9
    $region8: #{tpu_custom_call.1} parent=1 // pred_region
      _
    $region9: #{tpu_custom_call.1} parent=1 // pred_fallthru
      _
    // Predicated region
    $region10: #{tpu_custom_call.1} parent=1 // pred_check
      _
    $region11: #{tpu_custom_call.1} parent=1 // pred_check_branch
      %17 = sbr.rel (0) target = $region13
    $region12: #{tpu_custom_call.1} parent=1 // pred_region
      %s19 = ssub.s32 6144, 6144
      %20 = vsyncadd [#allocation4], %s19
      %s21 = sshll.u32 [#allocation3], 4
      %s22 = int_to_ptr.vmem [resolvable:$true] %s21
      %27 = dma.hbm_to_vmem [thread:$0]  %s2, 6144, %s22, [#allocation4], 384, 384, 24
    $region13: #{tpu_custom_call.1} parent=1 // pred_fallthru
      _
    // Predicated region
    $region14: #{tpu_custom_call.1} parent=1 // pred_check
      _
    $region15: #{tpu_custom_call.1} parent=1 // pred_check_branch
      %29 = sbr.rel (0) target = $region17
    $region16: #{tpu_custom_call.1} parent=1 // pred_region
      _
    $region17: #{tpu_custom_call.1} parent=1 // pred_fallthru
      _
    // Predicated region
    $region18: #{tpu_custom_call.1} parent=1 // pred_check
      _
    $region19: #{tpu_custom_call.1} parent=1 // pred_check_branch
      %31 = sbr.rel (0) target = $region21
    $region20: #{tpu_custom_call.1} parent=1 // pred_region
      _
    $region21: #{tpu_custom_call.1} parent=1 // pred_fallthru
      _
    // Predicated region
    $region22: #{tpu_custom_call.1} parent=1 // pred_check
      _
    $region23: #{tpu_custom_call.1} parent=1 // pred_check_branch
      %33 = sbr.rel (0) target = $region25
    $region24: #{tpu_custom_call.1} parent=1 // pred_region
      %34 = dma.done [#allocation4], 6144
    $region25: #{tpu_custom_call.1} parent=1 // pred_fallthru
      _
    %v35 = vld [vmem:[%s0] sm:$0xff]
    %v36 = vld [vmem:[%s0 + $0x8] sm:$0xff]
    %v37 = vld [vmem:[%s0 + $0x10] sm:$0xff]
    %v38 = vld [vmem:[%s0 + $0x18] sm:$0xff]
    %v39 = vld [vmem:[%s0 + $0x20] sm:$0xff]
    %v40 = vld [vmem:[%s0 + $0x28] sm:$0xff]
    %v41 = vld [vmem:[%s0 + $0x30] sm:$0xff]
    %v42 = vld [vmem:[%s0 + $0x38] sm:$0xff]
    %v43 = vld [vmem:[%s1] sm:$0xff]
    %v44 = vld [vmem:[%s1 + $0x8] sm:$0xff]
    %v45 = vld [vmem:[%s1 + $0x10] sm:$0xff]
    %v46 = vld [vmem:[%s1 + $0x18] sm:$0xff]
    %v47 = vld [vmem:[%s1 + $0x20] sm:$0xff]
    %v48 = vld [vmem:[%s1 + $0x28] sm:$0xff]
    %v49 = vld [vmem:[%s3] sm:$0x7]
    %v51 = vlaneseq
    %v52 = vshrl.u32 %v51, 7
    %v53 = vsub.s32 0, %v52
    %v54 = vrot.slane %v49, %v53
    %v55 = vlaneseq
    %v56 = vshrl.u32 %v55, 7
    %v57 = vsub.s32 1, %v56
    %v58 = vrot.slane %v49, %v57
    %v59 = vlaneseq
    %v60 = vshrl.u32 %v59, 7
    %v61 = vsub.s32 2, %v60
    %v62 = vrot.slane %v49, %v61
    %vm66 = vcmask 130048
    %v68 = vsel %vm66, %v35, 0
    %v71 = vsel %vm66, %v36, 0
    %v74 = vsel %vm66, %v37, 0
    %v77 = vsel %vm66, %v38, 0
    %v80 = vsel %vm66, %v39, 0
    %v83 = vsel %vm66, %v40, 0
    %v86 = vsel %vm66, %v41, 0
    %v89 = vsel %vm66, %v42, 0
    %91 = vmatprep.subr.mxu0 0.0
    %92 = vmatpush1.msra.mxu0 0.0
    %93 = vmatprep.subr.mxu0 0.0
    %94 = vmatpush1.msra.mxu0 0.0
    %95 = vmatprep.subr.mxu0 0.0
    %96 = vmatpush1.msra.mxu0 0.0
    %97 = vmatprep.subr.mxu0 0.0
    %98 = vmatpush1.msra.mxu0 0.0
    %99 = vmatprep.subr.mxu0 0.0
    %100 = vmatpush1.msra.mxu0 0.0
    %101 = vmatprep.subr.mxu0 0.0
    %102 = vmatpush1.msra.mxu0 0.0
    %103 = vmatprep.subr.mxu0 0.0
    %104 = vmatpush1.msra.mxu0 0.0
    %105 = vmatprep.subr.mxu0 0.0
    %106 = vmatpush1.msra.mxu0 0.0
    %107 = vmatprep.subr.mxu0 0.0
    %108 = vmatpush1.msra.mxu0 0.0
    %109 = vmatprep.subr.mxu0 0.0
    %110 = vmatpush1.msra.mxu0 0.0
    %111 = vmatprep.subr.mxu0 0.0
    %112 = vmatpush1.msra.mxu0 0.0
    %113 = vmatprep.subr.mxu0 0.0
    %114 = vmatpush1.msra.mxu0 0.0
    %115 = vmatprep.subr.mxu0 0.0
    %116 = vmatpush1.msra.mxu0 0.0
    %117 = vmatprep.subr.mxu0 0.0
    %118 = vmatpush1.msra.mxu0 0.0
    %119 = vmatprep.subr.mxu0 %v47
    %120 = vmatpush1.msra.mxu0 %v46
    %121 = vmatprep.subr.mxu0 %v44
    %122 = vmatpush1.msra.mxu0 %v43
    %123 = vmatprep.subr.mxu0 0.0
    %124 = vmatpush2.msra.mxu0 0.0
    %125 = vmatprep.subr.mxu0 0.0
    %126 = vmatpush2.msra.mxu0 0.0
    %127 = vmatprep.subr.mxu0 0.0
    %128 = vmatpush2.msra.mxu0 0.0
    %129 = vmatprep.subr.mxu0 0.0
    %130 = vmatpush2.msra.mxu0 0.0
    %131 = vmatprep.subr.mxu0 0.0
    %132 = vmatpush2.msra.mxu0 0.0
    %133 = vmatprep.subr.mxu0 0.0
    %134 = vmatpush2.msra.mxu0 0.0
    %135 = vmatprep.subr.mxu0 0.0
    %136 = vmatpush2.msra.mxu0 0.0
    %137 = vmatprep.subr.mxu0 0.0
    %138 = vmatpush2.msra.mxu0 0.0
    %139 = vmatprep.subr.mxu0 0.0
    %140 = vmatpush2.msra.mxu0 0.0
    %141 = vmatprep.subr.mxu0 0.0
    %142 = vmatpush2.msra.mxu0 0.0
    %143 = vmatprep.subr.mxu0 0.0
    %144 = vmatpush2.msra.mxu0 0.0
    %145 = vmatprep.subr.mxu0 0.0
    %146 = vmatpush2.msra.mxu0 0.0
    %147 = vmatprep.subr.mxu0 0.0
    %148 = vmatpush2.msra.mxu0 0.0
    %149 = vmatprep.subr.mxu0 0.0
    %150 = vmatpush2.msra.mxu0 0.0
    %151 = vmatprep.subr.mxu0 0.0
    %152 = vmatpush2.msra.mxu0 0.0
    %153 = vmatprep.subr.mxu0 0.0
    %154 = vmatpush2.msra.mxu0 0.0
    %155 = vmatprep.mubr.f32.mxu0 0.0
    %156 = vmatmul.mubr.f32.gmra.mxu0 %v68
    %v157 = vpop.f32.mrf.mxu0
    %v158 = vadd.f32 %v54, %v157
    %v159 = vpop.f32.mrf.mxu0
    %v160 = vadd.f32 %v58, %v159
    %161 = vmatprep.mubr.f32.mxu0 0.0
    %162 = vmatmul.mubr.f32.gmra.mxu0 %v71
    %v163 = vpop.f32.mrf.mxu0
    %v164 = vadd.f32 %v54, %v163
    %v165 = vpop.f32.mrf.mxu0
    %v166 = vadd.f32 %v58, %v165
    %167 = vmatprep.mubr.f32.mxu0 0.0
    %168 = vmatmul.mubr.f32.gmra.mxu0 %v74
    %v169 = vpop.f32.mrf.mxu0
    %v170 = vadd.f32 %v54, %v169
    %v171 = vpop.f32.mrf.mxu0
    %v172 = vadd.f32 %v58, %v171
    %173 = vmatprep.mubr.f32.mxu0 0.0
    %174 = vmatmul.mubr.f32.gmra.mxu0 %v77
    %v175 = vpop.f32.mrf.mxu0
    %v176 = vadd.f32 %v54, %v175
    %v177 = vpop.f32.mrf.mxu0
    %v178 = vadd.f32 %v58, %v177
    %179 = vmatprep.mubr.f32.mxu0 0.0
    %180 = vmatmul.mubr.f32.gmra.mxu0 %v80
    %v181 = vpop.f32.mrf.mxu0
    %v182 = vadd.f32 %v54, %v181
    %v183 = vpop.f32.mrf.mxu0
    %v184 = vadd.f32 %v58, %v183
    %185 = vmatprep.mubr.f32.mxu0 0.0
    %186 = vmatmul.mubr.f32.gmra.mxu0 %v83
    %v187 = vpop.f32.mrf.mxu0
    %v188 = vadd.f32 %v54, %v187
    %v189 = vpop.f32.mrf.mxu0
    %v190 = vadd.f32 %v58, %v189
    %191 = vmatprep.mubr.f32.mxu0 0.0
    %192 = vmatmul.mubr.f32.gmra.mxu0 %v86
    %v193 = vpop.f32.mrf.mxu0
    %v194 = vadd.f32 %v54, %v193
    %v195 = vpop.f32.mrf.mxu0
    %v196 = vadd.f32 %v58, %v195
    %197 = vmatprep.mubr.f32.mxu0 0.0
    %198 = vmatmul.mubr.f32.gmra.mxu0 %v89
    %v199 = vpop.f32.mrf.mxu0
    %v200 = vadd.f32 %v54, %v199
    %v201 = vpop.f32.mrf.mxu0
    %v202 = vadd.f32 %v58, %v201
    %203 = vdwg.mxu0
    %204 = vmatprep.subr.mxu0 0.0
    %205 = vmatpush1.msra.mxu0 0.0
    %206 = vmatprep.subr.mxu0 0.0
    %207 = vmatpush1.msra.mxu0 0.0
    %208 = vmatprep.subr.mxu0 0.0
    %209 = vmatpush1.msra.mxu0 0.0
    %210 = vmatprep.subr.mxu0 0.0
    %211 = vmatpush1.msra.mxu0 0.0
    %212 = vmatprep.subr.mxu0 0.0
    %213 = vmatpush1.msra.mxu0 0.0
    %214 = vmatprep.subr.mxu0 0.0
    %215 = vmatpush1.msra.mxu0 0.0
    %216 = vmatprep.subr.mxu0 0.0
    %217 = vmatpush1.msra.mxu0 0.0
    %218 = vmatprep.subr.mxu0 0.0
    %219 = vmatpush1.msra.mxu0 0.0
    %220 = vmatprep.subr.mxu0 0.0
    %221 = vmatpush1.msra.mxu0 0.0
    %222 = vmatprep.subr.mxu0 0.0
    %223 = vmatpush1.msra.mxu0 0.0
    %224 = vmatprep.subr.mxu0 0.0
    %225 = vmatpush1.msra.mxu0 0.0
    %226 = vmatprep.subr.mxu0 0.0
    %227 = vmatpush1.msra.mxu0 0.0
    %228 = vmatprep.subr.mxu0 0.0
    %229 = vmatpush1.msra.mxu0 0.0
    %230 = vmatprep.subr.mxu0 0.0
    %231 = vmatpush1.msra.mxu0 0.0
    %232 = vmatprep.subr.mxu0 0.0
    %233 = vmatpush1.msra.mxu0 %v48
    %234 = vmatprep.subr.mxu0 0.0
    %235 = vmatpush1.msra.mxu0 %v45
    %236 = vmatprep.subr.mxu0 0.0
    %237 = vmatpush2.msra.mxu0 0.0
    %238 = vmatprep.subr.mxu0 0.0
    %239 = vmatpush2.msra.mxu0 0.0
    %240 = vmatprep.subr.mxu0 0.0
    %241 = vmatpush2.msra.mxu0 0.0
    %242 = vmatprep.subr.mxu0 0.0
    %243 = vmatpush2.msra.mxu0 0.0
    %244 = vmatprep.subr.mxu0 0.0
    %245 = vmatpush2.msra.mxu0 0.0
    %246 = vmatprep.subr.mxu0 0.0
    %247 = vmatpush2.msra.mxu0 0.0
    %248 = vmatprep.subr.mxu0 0.0
    %249 = vmatpush2.msra.mxu0 0.0
    %250 = vmatprep.subr.mxu0 0.0
    %251 = vmatpush2.msra.mxu0 0.0
    %252 = vmatprep.subr.mxu0 0.0
    %253 = vmatpush2.msra.mxu0 0.0
    %254 = vmatprep.subr.mxu0 0.0
    %255 = vmatpush2.msra.mxu0 0.0
    %256 = vmatprep.subr.mxu0 0.0
    %257 = vmatpush2.msra.mxu0 0.0
    %258 = vmatprep.subr.mxu0 0.0
    %259 = vmatpush2.msra.mxu0 0.0
    %260 = vmatprep.subr.mxu0 0.0
    %261 = vmatpush2.msra.mxu0 0.0
    %262 = vmatprep.subr.mxu0 0.0
    %263 = vmatpush2.msra.mxu0 0.0
    %264 = vmatprep.subr.mxu0 0.0
    %265 = vmatpush2.msra.mxu0 0.0
    %266 = vmatprep.subr.mxu0 0.0
    %267 = vmatpush2.msra.mxu0 0.0
    %268 = vmatprep.mubr.f32.mxu0 0.0
    %269 = vmatmul.mubr.f32.gmra.mxu0 %v68
    %v270 = vpop.f32.mrf.mxu0
    %v271 = vadd.f32 %v62, %v270
    %v272 = vpop.f32.mrf.mxu0
    %273 = vmatprep.mubr.f32.mxu0 0.0
    %274 = vmatmul.mubr.f32.gmra.mxu0 %v71
    %v275 = vpop.f32.mrf.mxu0
    %v276 = vadd.f32 %v62, %v275
    %v277 = vpop.f32.mrf.mxu0
    %278 = vmatprep.mubr.f32.mxu0 0.0
    %279 = vmatmul.mubr.f32.gmra.mxu0 %v74
    %v280 = vpop.f32.mrf.mxu0
    %v281 = vadd.f32 %v62, %v280
    %v282 = vpop.f32.mrf.mxu0
    %283 = vmatprep.mubr.f32.mxu0 0.0
    %284 = vmatmul.mubr.f32.gmra.mxu0 %v77
    %v285 = vpop.f32.mrf.mxu0
    %v286 = vadd.f32 %v62, %v285
    %v287 = vpop.f32.mrf.mxu0
    %288 = vmatprep.mubr.f32.mxu0 0.0
    %289 = vmatmul.mubr.f32.gmra.mxu0 %v80
    %v290 = vpop.f32.mrf.mxu0
    %v291 = vadd.f32 %v62, %v290
    %v292 = vpop.f32.mrf.mxu0
    %293 = vmatprep.mubr.f32.mxu0 0.0
    %294 = vmatmul.mubr.f32.gmra.mxu0 %v83
    %v295 = vpop.f32.mrf.mxu0
    %v296 = vadd.f32 %v62, %v295
    %v297 = vpop.f32.mrf.mxu0
    %298 = vmatprep.mubr.f32.mxu0 0.0
    %299 = vmatmul.mubr.f32.gmra.mxu0 %v86
    %v300 = vpop.f32.mrf.mxu0
    %v301 = vadd.f32 %v62, %v300
    %v302 = vpop.f32.mrf.mxu0
    %303 = vmatprep.mubr.f32.mxu0 0.0
    %304 = vmatmul.mubr.f32.gmra.mxu0 %v89
    %v305 = vpop.f32.mrf.mxu0
    %v306 = vadd.f32 %v62, %v305
    %v307 = vpop.f32.mrf.mxu0
    %308 = vdwg.mxu0
    %309 = vst [vmem:[#allocation2] sm:$0xff] %v158
    %310 = vst [vmem:[#allocation2 + $0x8] sm:$0xff] %v160
    %311 = vst [vmem:[#allocation2 + $0x10] sm:$0xff] %v271
    %312 = vst [vmem:[#allocation2 + $0x18] sm:$0xff] %v164
    %313 = vst [vmem:[#allocation2 + $0x20] sm:$0xff] %v166
    %314 = vst [vmem:[#allocation2 + $0x28] sm:$0xff] %v276
    %315 = vst [vmem:[#allocation2 + $0x30] sm:$0xff] %v170
    %316 = vst [vmem:[#allocation2 + $0x38] sm:$0xff] %v172
    %317 = vst [vmem:[#allocation2 + $0x40] sm:$0xff] %v281
    %318 = vst [vmem:[#allocation2 + $0x48] sm:$0xff] %v176
    %319 = vst [vmem:[#allocation2 + $0x50] sm:$0xff] %v178
    %320 = vst [vmem:[#allocation2 + $0x58] sm:$0xff] %v286
    %321 = vst [vmem:[#allocation2 + $0x60] sm:$0xff] %v182
    %322 = vst [vmem:[#allocation2 + $0x68] sm:$0xff] %v184
    %323 = vst [vmem:[#allocation2 + $0x70] sm:$0xff] %v291
    %324 = vst [vmem:[#allocation2 + $0x78] sm:$0xff] %v188
    %325 = vst [vmem:[#allocation2 + $0x80] sm:$0xff] %v190
    %326 = vst [vmem:[#allocation2 + $0x88] sm:$0xff] %v296
    %327 = vst [vmem:[#allocation2 + $0x90] sm:$0xff] %v194
    %328 = vst [vmem:[#allocation2 + $0x98] sm:$0xff] %v196
    %329 = vst [vmem:[#allocation2 + $0xa0] sm:$0xff] %v301
    %330 = vst [vmem:[#allocation2 + $0xa8] sm:$0xff] %v200
    %331 = vst [vmem:[#allocation2 + $0xb0] sm:$0xff] %v202
    %332 = vst [vmem:[#allocation2 + $0xb8] sm:$0xff] %v306
    %v333 = vld [vmem:[#allocation3] sm:$0xff]
    %v334 = vld [vmem:[#allocation3 + $0x8] sm:$0xff]
    %v335 = vld [vmem:[#allocation3 + $0x10] sm:$0xff]
    %v336 = vld [vmem:[#allocation3 + $0x18] sm:$0xff]
    %v337 = vld [vmem:[#allocation3 + $0x20] sm:$0xff]
    %v338 = vld [vmem:[#allocation3 + $0x28] sm:$0xff]
    %v339 = vld [vmem:[#allocation3 + $0x30] sm:$0xff]
    %v340 = vld [vmem:[#allocation3 + $0x38] sm:$0xff]
    %v341 = vld [vmem:[#allocation3 + $0x40] sm:$0xff]
    %v342 = vld [vmem:[#allocation3 + $0x48] sm:$0xff]
    %v343 = vld [vmem:[#allocation3 + $0x50] sm:$0xff]
    %v344 = vld [vmem:[#allocation3 + $0x58] sm:$0xff]
    %v345 = vld [vmem:[#allocation3 + $0x60] sm:$0xff]
    %v346 = vld [vmem:[#allocation3 + $0x68] sm:$0xff]
    %v347 = vld [vmem:[#allocation3 + $0x70] sm:$0xff]
    %v348 = vld [vmem:[#allocation3 + $0x78] sm:$0xff]
    %v349 = vld [vmem:[#allocation3 + $0x80] sm:$0xff]
    %v350 = vld [vmem:[#allocation3 + $0x88] sm:$0xff]
    %v351 = vld [vmem:[#allocation3 + $0x90] sm:$0xff]
    %v352 = vld [vmem:[#allocation3 + $0x98] sm:$0xff]
    %v353 = vld [vmem:[#allocation3 + $0xa0] sm:$0xff]
    %v354 = vld [vmem:[#allocation3 + $0xa8] sm:$0xff]
    %v355 = vld [vmem:[#allocation3 + $0xb0] sm:$0xff]
    %v356 = vld [vmem:[#allocation3 + $0xb8] sm:$0xff]
    %v357 = vld [vmem:[#allocation3 + $0xc0] sm:$0xff]
    %v358 = vld [vmem:[#allocation3 + $0xc8] sm:$0xff]
    %v359 = vld [vmem:[#allocation3 + $0xd0] sm:$0xff]
    %v360 = vld [vmem:[#allocation3 + $0xd8] sm:$0xff]
    %v361 = vld [vmem:[#allocation3 + $0xe0] sm:$0xff]
    %v362 = vld [vmem:[#allocation3 + $0xe8] sm:$0xff]
    %v363 = vld [vmem:[#allocation3 + $0xf0] sm:$0xff]
    %v364 = vld [vmem:[#allocation3 + $0xf8] sm:$0xff]
    %v365 = vld [vmem:[#allocation3 + $0x100] sm:$0xff]
    %v366 = vld [vmem:[#allocation3 + $0x108] sm:$0xff]
    %v367 = vld [vmem:[#allocation3 + $0x110] sm:$0xff]
    %v368 = vld [vmem:[#allocation3 + $0x118] sm:$0xff]
    %v369 = vld [vmem:[#allocation3 + $0x120] sm:$0xff]
    %v370 = vld [vmem:[#allocation3 + $0x128] sm:$0xff]
    %v371 = vld [vmem:[#allocation3 + $0x130] sm:$0xff]
    %v372 = vld [vmem:[#allocation3 + $0x138] sm:$0xff]
    %v373 = vld [vmem:[#allocation3 + $0x140] sm:$0xff]
    %v374 = vld [vmem:[#allocation3 + $0x148] sm:$0xff]
    %v375 = vld [vmem:[#allocation3 + $0x150] sm:$0xff]
    %v376 = vld [vmem:[#allocation3 + $0x158] sm:$0xff]
    %v377 = vld [vmem:[#allocation3 + $0x160] sm:$0xff]
    %v378 = vld [vmem:[#allocation3 + $0x168] sm:$0xff]
    %v379 = vld [vmem:[#allocation3 + $0x170] sm:$0xff]
    %v380 = vld [vmem:[#allocation3 + $0x178] sm:$0xff]
    %v381 = vld [vmem:[%s4] sm:$0x1]
    %v383 = vlaneseq
    %v384 = vshrl.u32 %v383, 7
    %v385 = vsub.s32 0, %v384
    %v386 = vrot.slane %v381, %v385
    %v388 = vld [vmem:[#allocation2] sm:$0xff]
    %v389 = vld [vmem:[#allocation2 + $0x8] sm:$0xff]
    %v390 = vld [vmem:[#allocation2 + $0x10] sm:$0xff]
    %391 = vmatprep.subr.mxu0 %v379
    %392 = vmatpush1.msra.mxu0 %v378
    %393 = vmatprep.subr.mxu0 %v376
    %394 = vmatpush1.msra.mxu0 %v375
    %395 = vmatprep.subr.mxu0 %v373
    %396 = vmatpush1.msra.mxu0 %v372
    %397 = vmatprep.subr.mxu0 %v370
    %398 = vmatpush1.msra.mxu0 %v369
    %399 = vmatprep.subr.mxu0 %v367
    %400 = vmatpush1.msra.mxu0 %v366
    %401 = vmatprep.subr.mxu0 %v364
    %402 = vmatpush1.msra.mxu0 %v363
    %403 = vmatprep.subr.mxu0 %v361
    %404 = vmatpush1.msra.mxu0 %v360
    %405 = vmatprep.subr.mxu0 %v358
    %406 = vmatpush1.msra.mxu0 %v357
    %407 = vmatprep.subr.mxu0 %v355
    %408 = vmatpush1.msra.mxu0 %v354
    %409 = vmatprep.subr.mxu0 %v352
    %410 = vmatpush1.msra.mxu0 %v351
    %411 = vmatprep.subr.mxu0 %v349
    %412 = vmatpush1.msra.mxu0 %v348
    %413 = vmatprep.subr.mxu0 %v346
    %414 = vmatpush1.msra.mxu0 %v345
    %415 = vmatprep.subr.mxu0 %v343
    %416 = vmatpush1.msra.mxu0 %v342
    %417 = vmatprep.subr.mxu0 %v340
    %418 = vmatpush1.msra.mxu0 %v339
    %419 = vmatprep.subr.mxu0 %v337
    %420 = vmatpush1.msra.mxu0 %v336
    %421 = vmatprep.subr.mxu0 %v334
    %422 = vmatpush1.msra.mxu0 %v333
    %423 = vmatprep.subr.mxu0 0.0
    %424 = vmatpush2.msra.mxu0 0.0
    %425 = vmatprep.subr.mxu0 0.0
    %426 = vmatpush2.msra.mxu0 0.0
    %427 = vmatprep.subr.mxu0 0.0
    %428 = vmatpush2.msra.mxu0 0.0
    %429 = vmatprep.subr.mxu0 0.0
    %430 = vmatpush2.msra.mxu0 0.0
    %431 = vmatprep.subr.mxu0 0.0
    %432 = vmatpush2.msra.mxu0 0.0
    %433 = vmatprep.subr.mxu0 0.0
    %434 = vmatpush2.msra.mxu0 0.0
    %435 = vmatprep.subr.mxu0 0.0
    %436 = vmatpush2.msra.mxu0 0.0
    %437 = vmatprep.subr.mxu0 0.0
    %438 = vmatpush2.msra.mxu0 0.0
    %439 = vmatprep.subr.mxu0 0.0
    %440 = vmatpush2.msra.mxu0 0.0
    %441 = vmatprep.subr.mxu0 0.0
    %442 = vmatpush2.msra.mxu0 0.0
    %443 = vmatprep.subr.mxu0 0.0
    %444 = vmatpush2.msra.mxu0 0.0
    %445 = vmatprep.subr.mxu0 0.0
    %446 = vmatpush2.msra.mxu0 0.0
    %447 = vmatprep.subr.mxu0 0.0
    %448 = vmatpush2.msra.mxu0 0.0
    %449 = vmatprep.subr.mxu0 0.0
    %450 = vmatpush2.msra.mxu0 0.0
    %451 = vmatprep.subr.mxu0 0.0
    %452 = vmatpush2.msra.mxu0 0.0
    %453 = vmatprep.subr.mxu0 0.0
    %454 = vmatpush2.msra.mxu0 0.0
    %455 = vmatprep.mubr.f32.mxu0 0.0
    %456 = vmatmul.mubr.f32.gmra.mxu0 0.0
    %v457 = vpop.f32.mrf.mxu0
    %v458 = vadd.f32 0.0, %v457
    %v459 = vpop.f32.mrf.mxu0
    %v460 = vadd.f32 0.0, %v459
    %461 = vdwg.mxu0
    %462 = vmatprep.subr.mxu0 0.0
    %463 = vmatpush1.msra.mxu0 %v380
    %464 = vmatprep.subr.mxu0 0.0
    %465 = vmatpush1.msra.mxu0 %v377
    %466 = vmatprep.subr.mxu0 0.0
    %467 = vmatpush1.msra.mxu0 %v374
    %468 = vmatprep.subr.mxu0 0.0
    %469 = vmatpush1.msra.mxu0 %v371
    %470 = vmatprep.subr.mxu0 0.0
    %471 = vmatpush1.msra.mxu0 %v368
    %472 = vmatprep.subr.mxu0 0.0
    %473 = vmatpush1.msra.mxu0 %v365
    %474 = vmatprep.subr.mxu0 0.0
    %475 = vmatpush1.msra.mxu0 %v362
    %476 = vmatprep.subr.mxu0 0.0
    %477 = vmatpush1.msra.mxu0 %v359
    %478 = vmatprep.subr.mxu0 0.0
    %479 = vmatpush1.msra.mxu0 %v356
    %480 = vmatprep.subr.mxu0 0.0
    %481 = vmatpush1.msra.mxu0 %v353
    %482 = vmatprep.subr.mxu0 0.0
    %483 = vmatpush1.msra.mxu0 %v350
    %484 = vmatprep.subr.mxu0 0.0
    %485 = vmatpush1.msra.mxu0 %v347
    %486 = vmatprep.subr.mxu0 0.0
    %487 = vmatpush1.msra.mxu0 %v344
    %488 = vmatprep.subr.mxu0 0.0
    %489 = vmatpush1.msra.mxu0 %v341
    %490 = vmatprep.subr.mxu0 0.0
    %491 = vmatpush1.msra.mxu0 %v338
    %492 = vmatprep.subr.mxu0 0.0
    %493 = vmatpush1.msra.mxu0 %v335
    %494 = vmatprep.subr.mxu0 0.0
    %495 = vmatpush2.msra.mxu0 0.0
    %496 = vmatprep.subr.mxu0 0.0
    %497 = vmatpush2.msra.mxu0 0.0
    %498 = vmatprep.subr.mxu0 0.0
    %499 = vmatpush2.msra.mxu0 0.0
    %500 = vmatprep.subr.mxu0 0.0
    %501 = vmatpush2.msra.mxu0 0.0
    %502 = vmatprep.subr.mxu0 0.0
    %503 = vmatpush2.msra.mxu0 0.0
    %504 = vmatprep.subr.mxu0 0.0
    %505 = vmatpush2.msra.mxu0 0.0
    %506 = vmatprep.subr.mxu0 0.0
    %507 = vmatpush2.msra.mxu0 0.0
    %508 = vmatprep.subr.mxu0 0.0
    %509 = vmatpush2.msra.mxu0 0.0
    %510 = vmatprep.subr.mxu0 0.0
    %511 = vmatpush2.msra.mxu0 0.0
    %512 = vmatprep.subr.mxu0 0.0
    %513 = vmatpush2.msra.mxu0 0.0
    %514 = vmatprep.subr.mxu0 0.0
    %515 = vmatpush2.msra.mxu0 0.0
    %516 = vmatprep.subr.mxu0 0.0
    %517 = vmatpush2.msra.mxu0 0.0
    %518 = vmatprep.subr.mxu0 0.0
    %519 = vmatpush2.msra.mxu0 0.0
    %520 = vmatprep.subr.mxu0 0.0
    %521 = vmatpush2.msra.mxu0 0.0
    %522 = vmatprep.subr.mxu0 0.0
    %523 = vmatpush2.msra.mxu0 0.0
    %524 = vmatprep.subr.mxu0 0.0
    %525 = vmatpush2.msra.mxu0 0.0
    %526 = vmatprep.mubr.f32.mxu0 0.0
    %527 = vmatmul.mubr.f32.gmra.mxu0 0.0
    %v528 = vpop.f32.mrf.mxu0
    %v529 = vadd.f32 0.0, %v528
    %v530 = vpop.f32.mrf.mxu0
    %531 = vdwg.mxu0
    %v532 = vadd.f32 %v388, %v458
    %v533 = vxor.u32 %v532, 2147483648
    %v534 = vmul.f32 %v533, 1.442695
    %v535 = vpow.pop %v534
    %v536 = vadd.f32 %v535, 1.0
    %v537 = vrcp.pop %v536
    %v538 = vmul.f32 1.0, %v537
    %v539 = vadd.f32 %v389, %v460
    %v540 = vxor.u32 %v539, 2147483648
    %v541 = vmul.f32 %v540, 1.442695
    %v542 = vpow.pop %v541
    %v543 = vadd.f32 %v542, 1.0
    %v544 = vrcp.pop %v543
    %v545 = vmul.f32 1.0, %v544
    %v546 = vadd.f32 %v529, %v386
    %v547 = vmul.f32 %v538, %v546
    %v548 = vadd.f32 %v390, %v547
    %v549 = vtanh.pop %v548
    %v550 = vsub.f32 1.0, %v545
    %v551 = vmul.f32 %v550, %v549
    %v552 = vmul.f32 %v545, 0.0
    %v553 = vadd.f32 %v551, %v552
    %554 = vst [vmem:[#allocation6] sm:$0xff] %v553
    %s555 = scalar_lea.vmem [#allocation2], 24
    %v556 = vld [vmem:[%s555] sm:$0xff]
    %v557 = vld [vmem:[%s555 + $0x8] sm:$0xff]
    %v558 = vld [vmem:[%s555 + $0x10] sm:$0xff]
    %559 = vmatprep.subr.mxu0 %v379
    %560 = vmatpush1.msra.mxu0 %v378
    %561 = vmatprep.subr.mxu0 %v376
    %562 = vmatpush1.msra.mxu0 %v375
    %563 = vmatprep.subr.mxu0 %v373
    %564 = vmatpush1.msra.mxu0 %v372
    %565 = vmatprep.subr.mxu0 %v370
    %566 = vmatpush1.msra.mxu0 %v369
    %567 = vmatprep.subr.mxu0 %v367
    %568 = vmatpush1.msra.mxu0 %v366
    %569 = vmatprep.subr.mxu0 %v364
    %570 = vmatpush1.msra.mxu0 %v363
    %571 = vmatprep.subr.mxu0 %v361
    %572 = vmatpush1.msra.mxu0 %v360
    %573 = vmatprep.subr.mxu0 %v358
    %574 = vmatpush1.msra.mxu0 %v357
    %575 = vmatprep.subr.mxu0 %v355
    %576 = vmatpush1.msra.mxu0 %v354
    %577 = vmatprep.subr.mxu0 %v352
    %578 = vmatpush1.msra.mxu0 %v351
    %579 = vmatprep.subr.mxu0 %v349
    %580 = vmatpush1.msra.mxu0 %v348
    %581 = vmatprep.subr.mxu0 %v346
    %582 = vmatpush1.msra.mxu0 %v345
    %583 = vmatprep.subr.mxu0 %v343
    %584 = vmatpush1.msra.mxu0 %v342
    %585 = vmatprep.subr.mxu0 %v340
    %586 = vmatpush1.msra.mxu0 %v339
    %587 = vmatprep.subr.mxu0 %v337
    %588 = vmatpush1.msra.mxu0 %v336
    %589 = vmatprep.subr.mxu0 %v334
    %590 = vmatpush1.msra.mxu0 %v333
    %591 = vmatprep.subr.mxu0 0.0
    %592 = vmatpush2.msra.mxu0 0.0
    %593 = vmatprep.subr.mxu0 0.0
    %594 = vmatpush2.msra.mxu0 0.0
    %595 = vmatprep.subr.mxu0 0.0
    %596 = vmatpush2.msra.mxu0 0.0
    %597 = vmatprep.subr.mxu0 0.0
    %598 = vmatpush2.msra.mxu0 0.0
    %599 = vmatprep.subr.mxu0 0.0
    %600 = vmatpush2.msra.mxu0 0.0
    %601 = vmatprep.subr.mxu0 0.0
    %602 = vmatpush2.msra.mxu0 0.0
    %603 = vmatprep.subr.mxu0 0.0
    %604 = vmatpush2.msra.mxu0 0.0
    %605 = vmatprep.subr.mxu0 0.0
    %606 = vmatpush2.msra.mxu0 0.0
    %607 = vmatprep.subr.mxu0 0.0
    %608 = vmatpush2.msra.mxu0 0.0
    %609 = vmatprep.subr.mxu0 0.0
    %610 = vmatpush2.msra.mxu0 0.0
    %611 = vmatprep.subr.mxu0 0.0
    %612 = vmatpush2.msra.mxu0 0.0
    %613 = vmatprep.subr.mxu0 0.0
    %614 = vmatpush2.msra.mxu0 0.0
    %615 = vmatprep.subr.mxu0 0.0
    %616 = vmatpush2.msra.mxu0 0.0
    %617 = vmatprep.subr.mxu0 0.0
    %618 = vmatpush2.msra.mxu0 0.0
    %619 = vmatprep.subr.mxu0 0.0
    %620 = vmatpush2.msra.mxu0 0.0
    %621 = vmatprep.subr.mxu0 0.0
    %622 = vmatpush2.msra.mxu0 0.0
    %623 = vmatprep.mubr.f32.mxu0 0.0
    %624 = vmatmul.mubr.f32.gmra.mxu0 %v553
    %v625 = vpop.f32.mrf.mxu0
    %v626 = vadd.f32 0.0, %v625
    %v627 = vpop.f32.mrf.mxu0
    %v628 = vadd.f32 0.0, %v627
    %629 = vdwg.mxu0
    %630 = vmatprep.subr.mxu0 0.0
    %631 = vmatpush1.msra.mxu0 %v380
    %632 = vmatprep.subr.mxu0 0.0
    %633 = vmatpush1.msra.mxu0 %v377
    %634 = vmatprep.subr.mxu0 0.0
    %635 = vmatpush1.msra.mxu0 %v374
    %636 = vmatprep.subr.mxu0 0.0
    %637 = vmatpush1.msra.mxu0 %v371
    %638 = vmatprep.subr.mxu0 0.0
    %639 = vmatpush1.msra.mxu0 %v368
    %640 = vmatprep.subr.mxu0 0.0
    %641 = vmatpush1.msra.mxu0 %v365
    %642 = vmatprep.subr.mxu0 0.0
    %643 = vmatpush1.msra.mxu0 %v362
    %644 = vmatprep.subr.mxu0 0.0
    %645 = vmatpush1.msra.mxu0 %v359
    %646 = vmatprep.subr.mxu0 0.0
    %647 = vmatpush1.msra.mxu0 %v356
    %648 = vmatprep.subr.mxu0 0.0
    %649 = vmatpush1.msra.mxu0 %v353
    %650 = vmatprep.subr.mxu0 0.0
    %651 = vmatpush1.msra.mxu0 %v350
    %652 = vmatprep.subr.mxu0 0.0
    %653 = vmatpush1.msra.mxu0 %v347
    %654 = vmatprep.subr.mxu0 0.0
    %655 = vmatpush1.msra.mxu0 %v344
    %656 = vmatprep.subr.mxu0 0.0
    %657 = vmatpush1.msra.mxu0 %v341
    %658 = vmatprep.subr.mxu0 0.0
    %659 = vmatpush1.msra.mxu0 %v338
    %660 = vmatprep.subr.mxu0 0.0
    %661 = vmatpush1.msra.mxu0 %v335
    %662 = vmatprep.subr.mxu0 0.0
    %663 = vmatpush2.msra.mxu0 0.0
    %664 = vmatprep.subr.mxu0 0.0
    %665 = vmatpush2.msra.mxu0 0.0
    %666 = vmatprep.subr.mxu0 0.0
    %667 = vmatpush2.msra.mxu0 0.0
    %668 = vmatprep.subr.mxu0 0.0
    %669 = vmatpush2.msra.mxu0 0.0
    %670 = vmatprep.subr.mxu0 0.0
    %671 = vmatpush2.msra.mxu0 0.0
    %672 = vmatprep.subr.mxu0 0.0
    %673 = vmatpush2.msra.mxu0 0.0
    %674 = vmatprep.subr.mxu0 0.0
    %675 = vmatpush2.msra.mxu0 0.0
    %676 = vmatprep.subr.mxu0 0.0
    %677 = vmatpush2.msra.mxu0 0.0
    %678 = vmatprep.subr.mxu0 0.0
    %679 = vmatpush2.msra.mxu0 0.0
    %680 = vmatprep.subr.mxu0 0.0
    %681 = vmatpush2.msra.mxu0 0.0
    %682 = vmatprep.subr.mxu0 0.0
    %683 = vmatpush2.msra.mxu0 0.0
    %684 = vmatprep.subr.mxu0 0.0
    %685 = vmatpush2.msra.mxu0 0.0
    %686 = vmatprep.subr.mxu0 0.0
    %687 = vmatpush2.msra.mxu0 0.0
    %688 = vmatprep.subr.mxu0 0.0
    %689 = vmatpush2.msra.mxu0 0.0
    %690 = vmatprep.subr.mxu0 0.0
    %691 = vmatpush2.msra.mxu0 0.0
    %692 = vmatprep.subr.mxu0 0.0
    %693 = vmatpush2.msra.mxu0 0.0
    %694 = vmatprep.mubr.f32.mxu0 0.0
    %695 = vmatmul.mubr.f32.gmra.mxu0 %v553
    %v696 = vpop.f32.mrf.mxu0
    %v697 = vadd.f32 0.0, %v696
    %v698 = vpop.f32.mrf.mxu0
    %699 = vdwg.mxu0
    %v700 = vadd.f32 %v556, %v626
    %v701 = vxor.u32 %v700, 2147483648
    %v702 = vmul.f32 %v701, 1.442695
    %v703 = vpow.pop %v702
    %v704 = vadd.f32 %v703, 1.0
    %v705 = vrcp.pop %v704
    %v706 = vmul.f32 1.0, %v705
    %v707 = vadd.f32 %v557, %v628
    %v708 = vxor.u32 %v707, 2147483648
    %v709 = vmul.f32 %v708, 1.442695
    %v710 = vpow.pop %v709
    %v711 = vadd.f32 %v710, 1.0
    %v712 = vrcp.pop %v711
    %v713 = vmul.f32 1.0, %v712
    %v714 = vadd.f32 %v697, %v386
    %v715 = vmul.f32 %v706, %v714
    %v716 = vadd.f32 %v558, %v715
    %v717 = vtanh.pop %v716
    %v718 = vsub.f32 1.0, %v713
    %v719 = vmul.f32 %v718, %v717
    %v720 = vmul.f32 %v713, %v553
    %v721 = vadd.f32 %v719, %v720
    %s722 = scalar_lea.vmem [#allocation6], 8
    %723 = vst [vmem:[%s722] sm:$0xff] %v721
    %s724 = scalar_lea.vmem [#allocation2], 48
    %v725 = vld [vmem:[%s724] sm:$0xff]
    %v726 = vld [vmem:[%s724 + $0x8] sm:$0xff]
    %v727 = vld [vmem:[%s724 + $0x10] sm:$0xff]
    %728 = vmatprep.subr.mxu0 %v379
    %729 = vmatpush1.msra.mxu0 %v378
    %730 = vmatprep.subr.mxu0 %v376
    %731 = vmatpush1.msra.mxu0 %v375
    %732 = vmatprep.subr.mxu0 %v373
    %733 = vmatpush1.msra.mxu0 %v372
    %734 = vmatprep.subr.mxu0 %v370
    %735 = vmatpush1.msra.mxu0 %v369
    %736 = vmatprep.subr.mxu0 %v367
    %737 = vmatpush1.msra.mxu0 %v366
    %738 = vmatprep.subr.mxu0 %v364
    %739 = vmatpush1.msra.mxu0 %v363
    %740 = vmatprep.subr.mxu0 %v361
    %741 = vmatpush1.msra.mxu0 %v360
    %742 = vmatprep.subr.mxu0 %v358
    %743 = vmatpush1.msra.mxu0 %v357
    %744 = vmatprep.subr.mxu0 %v355
    %745 = vmatpush1.msra.mxu0 %v354
    %746 = vmatprep.subr.mxu0 %v352
    %747 = vmatpush1.msra.mxu0 %v351
    %748 = vmatprep.subr.mxu0 %v349
    %749 = vmatpush1.msra.mxu0 %v348
    %750 = vmatprep.subr.mxu0 %v346
    %751 = vmatpush1.msra.mxu0 %v345
    %752 = vmatprep.subr.mxu0 %v343
    %753 = vmatpush1.msra.mxu0 %v342
    %754 = vmatprep.subr.mxu0 %v340
    %755 = vmatpush1.msra.mxu0 %v339
    %756 = vmatprep.subr.mxu0 %v337
    %757 = vmatpush1.msra.mxu0 %v336
    %758 = vmatprep.subr.mxu0 %v334
    %759 = vmatpush1.msra.mxu0 %v333
    %760 = vmatprep.subr.mxu0 0.0
    %761 = vmatpush2.msra.mxu0 0.0
    %762 = vmatprep.subr.mxu0 0.0
    %763 = vmatpush2.msra.mxu0 0.0
    %764 = vmatprep.subr.mxu0 0.0
    %765 = vmatpush2.msra.mxu0 0.0
    %766 = vmatprep.subr.mxu0 0.0
    %767 = vmatpush2.msra.mxu0 0.0
    %768 = vmatprep.subr.mxu0 0.0
    %769 = vmatpush2.msra.mxu0 0.0
    %770 = vmatprep.subr.mxu0 0.0
    %771 = vmatpush2.msra.mxu0 0.0
    %772 = vmatprep.subr.mxu0 0.0
    %773 = vmatpush2.msra.mxu0 0.0
    %774 = vmatprep.subr.mxu0 0.0
    %775 = vmatpush2.msra.mxu0 0.0
    %776 = vmatprep.subr.mxu0 0.0
    %777 = vmatpush2.msra.mxu0 0.0
    %778 = vmatprep.subr.mxu0 0.0
    %779 = vmatpush2.msra.mxu0 0.0
    %780 = vmatprep.subr.mxu0 0.0
    %781 = vmatpush2.msra.mxu0 0.0
    %782 = vmatprep.subr.mxu0 0.0
    %783 = vmatpush2.msra.mxu0 0.0
    %784 = vmatprep.subr.mxu0 0.0
    %785 = vmatpush2.msra.mxu0 0.0
    %786 = vmatprep.subr.mxu0 0.0
    %787 = vmatpush2.msra.mxu0 0.0
    %788 = vmatprep.subr.mxu0 0.0
    %789 = vmatpush2.msra.mxu0 0.0
    %790 = vmatprep.subr.mxu0 0.0
    %791 = vmatpush2.msra.mxu0 0.0
    %792 = vmatprep.mubr.f32.mxu0 0.0
    %793 = vmatmul.mubr.f32.gmra.mxu0 %v721
    %v794 = vpop.f32.mrf.mxu0
    %v795 = vadd.f32 0.0, %v794
    %v796 = vpop.f32.mrf.mxu0
    %v797 = vadd.f32 0.0, %v796
    %798 = vdwg.mxu0
    %799 = vmatprep.subr.mxu0 0.0
    %800 = vmatpush1.msra.mxu0 %v380
    %801 = vmatprep.subr.mxu0 0.0
    %802 = vmatpush1.msra.mxu0 %v377
    %803 = vmatprep.subr.mxu0 0.0
    %804 = vmatpush1.msra.mxu0 %v374
    %805 = vmatprep.subr.mxu0 0.0
    %806 = vmatpush1.msra.mxu0 %v371
    %807 = vmatprep.subr.mxu0 0.0
    %808 = vmatpush1.msra.mxu0 %v368
    %809 = vmatprep.subr.mxu0 0.0
    %810 = vmatpush1.msra.mxu0 %v365
    %811 = vmatprep.subr.mxu0 0.0
    %812 = vmatpush1.msra.mxu0 %v362
    %813 = vmatprep.subr.mxu0 0.0
    %814 = vmatpush1.msra.mxu0 %v359
    %815 = vmatprep.subr.mxu0 0.0
    %816 = vmatpush1.msra.mxu0 %v356
    %817 = vmatprep.subr.mxu0 0.0
    %818 = vmatpush1.msra.mxu0 %v353
    %819 = vmatprep.subr.mxu0 0.0
    %820 = vmatpush1.msra.mxu0 %v350
    %821 = vmatprep.subr.mxu0 0.0
    %822 = vmatpush1.msra.mxu0 %v347
    %823 = vmatprep.subr.mxu0 0.0
    %824 = vmatpush1.msra.mxu0 %v344
    %825 = vmatprep.subr.mxu0 0.0
    %826 = vmatpush1.msra.mxu0 %v341
    %827 = vmatprep.subr.mxu0 0.0
    %828 = vmatpush1.msra.mxu0 %v338
    %829 = vmatprep.subr.mxu0 0.0
    %830 = vmatpush1.msra.mxu0 %v335
    %831 = vmatprep.subr.mxu0 0.0
    %832 = vmatpush2.msra.mxu0 0.0
    %833 = vmatprep.subr.mxu0 0.0
    %834 = vmatpush2.msra.mxu0 0.0
    %835 = vmatprep.subr.mxu0 0.0
    %836 = vmatpush2.msra.mxu0 0.0
    %837 = vmatprep.subr.mxu0 0.0
    %838 = vmatpush2.msra.mxu0 0.0
    %839 = vmatprep.subr.mxu0 0.0
    %840 = vmatpush2.msra.mxu0 0.0
    %841 = vmatprep.subr.mxu0 0.0
    %842 = vmatpush2.msra.mxu0 0.0
    %843 = vmatprep.subr.mxu0 0.0
    %844 = vmatpush2.msra.mxu0 0.0
    %845 = vmatprep.subr.mxu0 0.0
    %846 = vmatpush2.msra.mxu0 0.0
    %847 = vmatprep.subr.mxu0 0.0
    %848 = vmatpush2.msra.mxu0 0.0
    %849 = vmatprep.subr.mxu0 0.0
    %850 = vmatpush2.msra.mxu0 0.0
    %851 = vmatprep.subr.mxu0 0.0
    %852 = vmatpush2.msra.mxu0 0.0
    %853 = vmatprep.subr.mxu0 0.0
    %854 = vmatpush2.msra.mxu0 0.0
    %855 = vmatprep.subr.mxu0 0.0
    %856 = vmatpush2.msra.mxu0 0.0
    %857 = vmatprep.subr.mxu0 0.0
    %858 = vmatpush2.msra.mxu0 0.0
    %859 = vmatprep.subr.mxu0 0.0
    %860 = vmatpush2.msra.mxu0 0.0
    %861 = vmatprep.subr.mxu0 0.0
    %862 = vmatpush2.msra.mxu0 0.0
    %863 = vmatprep.mubr.f32.mxu0 0.0
    %864 = vmatmul.mubr.f32.gmra.mxu0 %v721
    %v865 = vpop.f32.mrf.mxu0
    %v866 = vadd.f32 0.0, %v865
    %v867 = vpop.f32.mrf.mxu0
    %868 = vdwg.mxu0
    %v869 = vadd.f32 %v725, %v795
    %v870 = vxor.u32 %v869, 2147483648
    %v871 = vmul.f32 %v870, 1.442695
    %v872 = vpow.pop %v871
    %v873 = vadd.f32 %v872, 1.0
    %v874 = vrcp.pop %v873
    %v875 = vmul.f32 1.0, %v874
    %v876 = vadd.f32 %v726, %v797
    %v877 = vxor.u32 %v876, 2147483648
    %v878 = vmul.f32 %v877, 1.442695
    %v879 = vpow.pop %v878
    %v880 = vadd.f32 %v879, 1.0
    %v881 = vrcp.pop %v880
    %v882 = vmul.f32 1.0, %v881
    %v883 = vadd.f32 %v866, %v386
    %v884 = vmul.f32 %v875, %v883
    %v885 = vadd.f32 %v727, %v884
    %v886 = vtanh.pop %v885
    %v887 = vsub.f32 1.0, %v882
    %v888 = vmul.f32 %v887, %v886
    %v889 = vmul.f32 %v882, %v721
    %v890 = vadd.f32 %v888, %v889
    %s891 = scalar_lea.vmem [#allocation6], 16
    %892 = vst [vmem:[%s891] sm:$0xff] %v890
    %s893 = scalar_lea.vmem [#allocation2], 72
    %v894 = vld [vmem:[%s893] sm:$0xff]
    %v895 = vld [vmem:[%s893 + $0x8] sm:$0xff]
    %v896 = vld [vmem:[%s893 + $0x10] sm:$0xff]
    %897 = vmatprep.subr.mxu0 %v379
    %898 = vmatpush1.msra.mxu0 %v378
    %899 = vmatprep.subr.mxu0 %v376
    %900 = vmatpush1.msra.mxu0 %v375
    %901 = vmatprep.subr.mxu0 %v373
    %902 = vmatpush1.msra.mxu0 %v372
    %903 = vmatprep.subr.mxu0 %v370
    %904 = vmatpush1.msra.mxu0 %v369
    %905 = vmatprep.subr.mxu0 %v367
    %906 = vmatpush1.msra.mxu0 %v366
    %907 = vmatprep.subr.mxu0 %v364
    %908 = vmatpush1.msra.mxu0 %v363
    %909 = vmatprep.subr.mxu0 %v361
    %910 = vmatpush1.msra.mxu0 %v360
    %911 = vmatprep.subr.mxu0 %v358
    %912 = vmatpush1.msra.mxu0 %v357
    %913 = vmatprep.subr.mxu0 %v355
    %914 = vmatpush1.msra.mxu0 %v354
    %915 = vmatprep.subr.mxu0 %v352
    %916 = vmatpush1.msra.mxu0 %v351
    %917 = vmatprep.subr.mxu0 %v349
    %918 = vmatpush1.msra.mxu0 %v348
    %919 = vmatprep.subr.mxu0 %v346
    %920 = vmatpush1.msra.mxu0 %v345
    %921 = vmatprep.subr.mxu0 %v343
    %922 = vmatpush1.msra.mxu0 %v342
    %923 = vmatprep.subr.mxu0 %v340
    %924 = vmatpush1.msra.mxu0 %v339
    %925 = vmatprep.subr.mxu0 %v337
    %926 = vmatpush1.msra.mxu0 %v336
    %927 = vmatprep.subr.mxu0 %v334
    %928 = vmatpush1.msra.mxu0 %v333
    %929 = vmatprep.subr.mxu0 0.0
    %930 = vmatpush2.msra.mxu0 0.0
    %931 = vmatprep.subr.mxu0 0.0
    %932 = vmatpush2.msra.mxu0 0.0
    %933 = vmatprep.subr.mxu0 0.0
    %934 = vmatpush2.msra.mxu0 0.0
    %935 = vmatprep.subr.mxu0 0.0
    %936 = vmatpush2.msra.mxu0 0.0
    %937 = vmatprep.subr.mxu0 0.0
    %938 = vmatpush2.msra.mxu0 0.0
    %939 = vmatprep.subr.mxu0 0.0
    %940 = vmatpush2.msra.mxu0 0.0
    %941 = vmatprep.subr.mxu0 0.0
    %942 = vmatpush2.msra.mxu0 0.0
    %943 = vmatprep.subr.mxu0 0.0
    %944 = vmatpush2.msra.mxu0 0.0
    %945 = vmatprep.subr.mxu0 0.0
    %946 = vmatpush2.msra.mxu0 0.0
    %947 = vmatprep.subr.mxu0 0.0
    %948 = vmatpush2.msra.mxu0 0.0
    %949 = vmatprep.subr.mxu0 0.0
    %950 = vmatpush2.msra.mxu0 0.0
    %951 = vmatprep.subr.mxu0 0.0
    %952 = vmatpush2.msra.mxu0 0.0
    %953 = vmatprep.subr.mxu0 0.0
    %954 = vmatpush2.msra.mxu0 0.0
    %955 = vmatprep.subr.mxu0 0.0
    %956 = vmatpush2.msra.mxu0 0.0
    %957 = vmatprep.subr.mxu0 0.0
    %958 = vmatpush2.msra.mxu0 0.0
    %959 = vmatprep.subr.mxu0 0.0
    %960 = vmatpush2.msra.mxu0 0.0
    %961 = vmatprep.mubr.f32.mxu0 0.0
    %962 = vmatmul.mubr.f32.gmra.mxu0 %v890
    %v963 = vpop.f32.mrf.mxu0
    %v964 = vadd.f32 0.0, %v963
    %v965 = vpop.f32.mrf.mxu0
    %v966 = vadd.f32 0.0, %v965
    %967 = vdwg.mxu0
    %968 = vmatprep.subr.mxu0 0.0
    %969 = vmatpush1.msra.mxu0 %v380
    %970 = vmatprep.subr.mxu0 0.0
    %971 = vmatpush1.msra.mxu0 %v377
    %972 = vmatprep.subr.mxu0 0.0
    %973 = vmatpush1.msra.mxu0 %v374
    %974 = vmatprep.subr.mxu0 0.0
    %975 = vmatpush1.msra.mxu0 %v371
    %976 = vmatprep.subr.mxu0 0.0
    %977 = vmatpush1.msra.mxu0 %v368
    %978 = vmatprep.subr.mxu0 0.0
    %979 = vmatpush1.msra.mxu0 %v365
    %980 = vmatprep.subr.mxu0 0.0
    %981 = vmatpush1.msra.mxu0 %v362
    %982 = vmatprep.subr.mxu0 0.0
    %983 = vmatpush1.msra.mxu0 %v359
    %984 = vmatprep.subr.mxu0 0.0
    %985 = vmatpush1.msra.mxu0 %v356
    %986 = vmatprep.subr.mxu0 0.0
    %987 = vmatpush1.msra.mxu0 %v353
    %988 = vmatprep.subr.mxu0 0.0
    %989 = vmatpush1.msra.mxu0 %v350
    %990 = vmatprep.subr.mxu0 0.0
    %991 = vmatpush1.msra.mxu0 %v347
    %992 = vmatprep.subr.mxu0 0.0
    %993 = vmatpush1.msra.mxu0 %v344
    %994 = vmatprep.subr.mxu0 0.0
    %995 = vmatpush1.msra.mxu0 %v341
    %996 = vmatprep.subr.mxu0 0.0
    %997 = vmatpush1.msra.mxu0 %v338
    %998 = vmatprep.subr.mxu0 0.0
    %999 = vmatpush1.msra.mxu0 %v335
    %1000 = vmatprep.subr.mxu0 0.0
    %1001 = vmatpush2.msra.mxu0 0.0
    %1002 = vmatprep.subr.mxu0 0.0
    %1003 = vmatpush2.msra.mxu0 0.0
    %1004 = vmatprep.subr.mxu0 0.0
    %1005 = vmatpush2.msra.mxu0 0.0
    %1006 = vmatprep.subr.mxu0 0.0
    %1007 = vmatpush2.msra.mxu0 0.0
    %1008 = vmatprep.subr.mxu0 0.0
    %1009 = vmatpush2.msra.mxu0 0.0
    %1010 = vmatprep.subr.mxu0 0.0
    %1011 = vmatpush2.msra.mxu0 0.0
    %1012 = vmatprep.subr.mxu0 0.0
    %1013 = vmatpush2.msra.mxu0 0.0
    %1014 = vmatprep.subr.mxu0 0.0
    %1015 = vmatpush2.msra.mxu0 0.0
    %1016 = vmatprep.subr.mxu0 0.0
    %1017 = vmatpush2.msra.mxu0 0.0
    %1018 = vmatprep.subr.mxu0 0.0
    %1019 = vmatpush2.msra.mxu0 0.0
    %1020 = vmatprep.subr.mxu0 0.0
    %1021 = vmatpush2.msra.mxu0 0.0
    %1022 = vmatprep.subr.mxu0 0.0
    %1023 = vmatpush2.msra.mxu0 0.0
    %1024 = vmatprep.subr.mxu0 0.0
    %1025 = vmatpush2.msra.mxu0 0.0
    %1026 = vmatprep.subr.mxu0 0.0
    %1027 = vmatpush2.msra.mxu0 0.0
    %1028 = vmatprep.subr.mxu0 0.0
    %1029 = vmatpush2.msra.mxu0 0.0
    %1030 = vmatprep.subr.mxu0 0.0
    %1031 = vmatpush2.msra.mxu0 0.0
    %1032 = vmatprep.mubr.f32.mxu0 0.0
    %1033 = vmatmul.mubr.f32.gmra.mxu0 %v890
    %v1034 = vpop.f32.mrf.mxu0
    %v1035 = vadd.f32 0.0, %v1034
    %v1036 = vpop.f32.mrf.mxu0
    %1037 = vdwg.mxu0
    %v1038 = vadd.f32 %v894, %v964
    %v1039 = vxor.u32 %v1038, 2147483648
    %v1040 = vmul.f32 %v1039, 1.442695
    %v1041 = vpow.pop %v1040
    %v1042 = vadd.f32 %v1041, 1.0
    %v1043 = vrcp.pop %v1042
    %v1044 = vmul.f32 1.0, %v1043
    %v1045 = vadd.f32 %v895, %v966
    %v1046 = vxor.u32 %v1045, 2147483648
    %v1047 = vmul.f32 %v1046, 1.442695
    %v1048 = vpow.pop %v1047
    %v1049 = vadd.f32 %v1048, 1.0
    %v1050 = vrcp.pop %v1049
    %v1051 = vmul.f32 1.0, %v1050
    %v1052 = vadd.f32 %v1035, %v386
    %v1053 = vmul.f32 %v1044, %v1052
    %v1054 = vadd.f32 %v896, %v1053
    %v1055 = vtanh.pop %v1054
    %v1056 = vsub.f32 1.0, %v1051
    %v1057 = vmul.f32 %v1056, %v1055
    %v1058 = vmul.f32 %v1051, %v890
    %v1059 = vadd.f32 %v1057, %v1058
    %s1060 = scalar_lea.vmem [#allocation6], 24
    %1061 = vst [vmem:[%s1060] sm:$0xff] %v1059
    %s1062 = scalar_lea.vmem [#allocation2], 96
    %v1063 = vld [vmem:[%s1062] sm:$0xff]
    %v1064 = vld [vmem:[%s1062 + $0x8] sm:$0xff]
    %v1065 = vld [vmem:[%s1062 + $0x10] sm:$0xff]
    %1066 = vmatprep.subr.mxu0 %v379
    %1067 = vmatpush1.msra.mxu0 %v378
    %1068 = vmatprep.subr.mxu0 %v376
    %1069 = vmatpush1.msra.mxu0 %v375
    %1070 = vmatprep.subr.mxu0 %v373
    %1071 = vmatpush1.msra.mxu0 %v372
    %1072 = vmatprep.subr.mxu0 %v370
    %1073 = vmatpush1.msra.mxu0 %v369
    %1074 = vmatprep.subr.mxu0 %v367
    %1075 = vmatpush1.msra.mxu0 %v366
    %1076 = vmatprep.subr.mxu0 %v364
    %1077 = vmatpush1.msra.mxu0 %v363
    %1078 = vmatprep.subr.mxu0 %v361
    %1079 = vmatpush1.msra.mxu0 %v360
    %1080 = vmatprep.subr.mxu0 %v358
    %1081 = vmatpush1.msra.mxu0 %v357
    %1082 = vmatprep.subr.mxu0 %v355
    %1083 = vmatpush1.msra.mxu0 %v354
    %1084 = vmatprep.subr.mxu0 %v352
    %1085 = vmatpush1.msra.mxu0 %v351
    %1086 = vmatprep.subr.mxu0 %v349
    %1087 = vmatpush1.msra.mxu0 %v348
    %1088 = vmatprep.subr.mxu0 %v346
    %1089 = vmatpush1.msra.mxu0 %v345
    %1090 = vmatprep.subr.mxu0 %v343
    %1091 = vmatpush1.msra.mxu0 %v342
    %1092 = vmatprep.subr.mxu0 %v340
    %1093 = vmatpush1.msra.mxu0 %v339
    %1094 = vmatprep.subr.mxu0 %v337
    %1095 = vmatpush1.msra.mxu0 %v336
    %1096 = vmatprep.subr.mxu0 %v334
    %1097 = vmatpush1.msra.mxu0 %v333
    %1098 = vmatprep.subr.mxu0 0.0
    %1099 = vmatpush2.msra.mxu0 0.0
    %1100 = vmatprep.subr.mxu0 0.0
    %1101 = vmatpush2.msra.mxu0 0.0
    %1102 = vmatprep.subr.mxu0 0.0
    %1103 = vmatpush2.msra.mxu0 0.0
    %1104 = vmatprep.subr.mxu0 0.0
    %1105 = vmatpush2.msra.mxu0 0.0
    %1106 = vmatprep.subr.mxu0 0.0
    %1107 = vmatpush2.msra.mxu0 0.0
    %1108 = vmatprep.subr.mxu0 0.0
    %1109 = vmatpush2.msra.mxu0 0.0
    %1110 = vmatprep.subr.mxu0 0.0
    %1111 = vmatpush2.msra.mxu0 0.0
    %1112 = vmatprep.subr.mxu0 0.0
    %1113 = vmatpush2.msra.mxu0 0.0
    %1114 = vmatprep.subr.mxu0 0.0
    %1115 = vmatpush2.msra.mxu0 0.0
    %1116 = vmatprep.subr.mxu0 0.0
    %1117 = vmatpush2.msra.mxu0 0.0
    %1118 = vmatprep.subr.mxu0 0.0
    %1119 = vmatpush2.msra.mxu0 0.0
    %1120 = vmatprep.subr.mxu0 0.0
    %1121 = vmatpush2.msra.mxu0 0.0
    %1122 = vmatprep.subr.mxu0 0.0
    %1123 = vmatpush2.msra.mxu0 0.0
    %1124 = vmatprep.subr.mxu0 0.0
    %1125 = vmatpush2.msra.mxu0 0.0
    %1126 = vmatprep.subr.mxu0 0.0
    %1127 = vmatpush2.msra.mxu0 0.0
    %1128 = vmatprep.subr.mxu0 0.0
    %1129 = vmatpush2.msra.mxu0 0.0
    %1130 = vmatprep.mubr.f32.mxu0 0.0
    %1131 = vmatmul.mubr.f32.gmra.mxu0 %v1059
    %v1132 = vpop.f32.mrf.mxu0
    %v1133 = vadd.f32 0.0, %v1132
    %v1134 = vpop.f32.mrf.mxu0
    %v1135 = vadd.f32 0.0, %v1134
    %1136 = vdwg.mxu0
    %1137 = vmatprep.subr.mxu0 0.0
    %1138 = vmatpush1.msra.mxu0 %v380
    %1139 = vmatprep.subr.mxu0 0.0
    %1140 = vmatpush1.msra.mxu0 %v377
    %1141 = vmatprep.subr.mxu0 0.0
    %1142 = vmatpush1.msra.mxu0 %v374
    %1143 = vmatprep.subr.mxu0 0.0
    %1144 = vmatpush1.msra.mxu0 %v371
    %1145 = vmatprep.subr.mxu0 0.0
    %1146 = vmatpush1.msra.mxu0 %v368
    %1147 = vmatprep.subr.mxu0 0.0
    %1148 = vmatpush1.msra.mxu0 %v365
    %1149 = vmatprep.subr.mxu0 0.0
    %1150 = vmatpush1.msra.mxu0 %v362
    %1151 = vmatprep.subr.mxu0 0.0
    %1152 = vmatpush1.msra.mxu0 %v359
    %1153 = vmatprep.subr.mxu0 0.0
    %1154 = vmatpush1.msra.mxu0 %v356
    %1155 = vmatprep.subr.mxu0 0.0
    %1156 = vmatpush1.msra.mxu0 %v353
    %1157 = vmatprep.subr.mxu0 0.0
    %1158 = vmatpush1.msra.mxu0 %v350
    %1159 = vmatprep.subr.mxu0 0.0
    %1160 = vmatpush1.msra.mxu0 %v347
    %1161 = vmatprep.subr.mxu0 0.0
    %1162 = vmatpush1.msra.mxu0 %v344
    %1163 = vmatprep.subr.mxu0 0.0
    %1164 = vmatpush1.msra.mxu0 %v341
    %1165 = vmatprep.subr.mxu0 0.0
    %1166 = vmatpush1.msra.mxu0 %v338
    %1167 = vmatprep.subr.mxu0 0.0
    %1168 = vmatpush1.msra.mxu0 %v335
    %1169 = vmatprep.subr.mxu0 0.0
    %1170 = vmatpush2.msra.mxu0 0.0
    %1171 = vmatprep.subr.mxu0 0.0
    %1172 = vmatpush2.msra.mxu0 0.0
    %1173 = vmatprep.subr.mxu0 0.0
    %1174 = vmatpush2.msra.mxu0 0.0
    %1175 = vmatprep.subr.mxu0 0.0
    %1176 = vmatpush2.msra.mxu0 0.0
    %1177 = vmatprep.subr.mxu0 0.0
    %1178 = vmatpush2.msra.mxu0 0.0
    %1179 = vmatprep.subr.mxu0 0.0
    %1180 = vmatpush2.msra.mxu0 0.0
    %1181 = vmatprep.subr.mxu0 0.0
    %1182 = vmatpush2.msra.mxu0 0.0
    %1183 = vmatprep.subr.mxu0 0.0
    %1184 = vmatpush2.msra.mxu0 0.0
    %1185 = vmatprep.subr.mxu0 0.0
    %1186 = vmatpush2.msra.mxu0 0.0
    %1187 = vmatprep.subr.mxu0 0.0
    %1188 = vmatpush2.msra.mxu0 0.0
    %1189 = vmatprep.subr.mxu0 0.0
    %1190 = vmatpush2.msra.mxu0 0.0
    %1191 = vmatprep.subr.mxu0 0.0
    %1192 = vmatpush2.msra.mxu0 0.0
    %1193 = vmatprep.subr.mxu0 0.0
    %1194 = vmatpush2.msra.mxu0 0.0
    %1195 = vmatprep.subr.mxu0 0.0
    %1196 = vmatpush2.msra.mxu0 0.0
    %1197 = vmatprep.subr.mxu0 0.0
    %1198 = vmatpush2.msra.mxu0 0.0
    %1199 = vmatprep.subr.mxu0 0.0
    %1200 = vmatpush2.msra.mxu0 0.0
    %1201 = vmatprep.mubr.f32.mxu0 0.0
    %1202 = vmatmul.mubr.f32.gmra.mxu0 %v1059
    %v1203 = vpop.f32.mrf.mxu0
    %v1204 = vadd.f32 0.0, %v1203
    %v1205 = vpop.f32.mrf.mxu0
    %1206 = vdwg.mxu0
    %v1207 = vadd.f32 %v1063, %v1133
    %v1208 = vxor.u32 %v1207, 2147483648
    %v1209 = vmul.f32 %v1208, 1.442695
    %v1210 = vpow.pop %v1209
    %v1211 = vadd.f32 %v1210, 1.0
    %v1212 = vrcp.pop %v1211
    %v1213 = vmul.f32 1.0, %v1212
    %v1214 = vadd.f32 %v1064, %v1135
    %v1215 = vxor.u32 %v1214, 2147483648
    %v1216 = vmul.f32 %v1215, 1.442695
    %v1217 = vpow.pop %v1216
    %v1218 = vadd.f32 %v1217, 1.0
    %v1219 = vrcp.pop %v1218
    %v1220 = vmul.f32 1.0, %v1219
    %v1221 = vadd.f32 %v1204, %v386
    %v1222 = vmul.f32 %v1213, %v1221
    %v1223 = vadd.f32 %v1065, %v1222
    %v1224 = vtanh.pop %v1223
    %v1225 = vsub.f32 1.0, %v1220
    %v1226 = vmul.f32 %v1225, %v1224
    %v1227 = vmul.f32 %v1220, %v1059
    %v1228 = vadd.f32 %v1226, %v1227
    %s1229 = scalar_lea.vmem [#allocation6], 32
    %1230 = vst [vmem:[%s1229] sm:$0xff] %v1228
    %s1231 = scalar_lea.vmem [#allocation2], 120
    %v1232 = vld [vmem:[%s1231] sm:$0xff]
    %v1233 = vld [vmem:[%s1231 + $0x8] sm:$0xff]
    %v1234 = vld [vmem:[%s1231 + $0x10] sm:$0xff]
    %1235 = vmatprep.subr.mxu0 %v379
    %1236 = vmatpush1.msra.mxu0 %v378
    %1237 = vmatprep.subr.mxu0 %v376
    %1238 = vmatpush1.msra.mxu0 %v375
    %1239 = vmatprep.subr.mxu0 %v373
    %1240 = vmatpush1.msra.mxu0 %v372
    %1241 = vmatprep.subr.mxu0 %v370
    %1242 = vmatpush1.msra.mxu0 %v369
    %1243 = vmatprep.subr.mxu0 %v367
    %1244 = vmatpush1.msra.mxu0 %v366
    %1245 = vmatprep.subr.mxu0 %v364
    %1246 = vmatpush1.msra.mxu0 %v363
    %1247 = vmatprep.subr.mxu0 %v361
    %1248 = vmatpush1.msra.mxu0 %v360
    %1249 = vmatprep.subr.mxu0 %v358
    %1250 = vmatpush1.msra.mxu0 %v357
    %1251 = vmatprep.subr.mxu0 %v355
    %1252 = vmatpush1.msra.mxu0 %v354
    %1253 = vmatprep.subr.mxu0 %v352
    %1254 = vmatpush1.msra.mxu0 %v351
    %1255 = vmatprep.subr.mxu0 %v349
    %1256 = vmatpush1.msra.mxu0 %v348
    %1257 = vmatprep.subr.mxu0 %v346
    %1258 = vmatpush1.msra.mxu0 %v345
    %1259 = vmatprep.subr.mxu0 %v343
    %1260 = vmatpush1.msra.mxu0 %v342
    %1261 = vmatprep.subr.mxu0 %v340
    %1262 = vmatpush1.msra.mxu0 %v339
    %1263 = vmatprep.subr.mxu0 %v337
    %1264 = vmatpush1.msra.mxu0 %v336
    %1265 = vmatprep.subr.mxu0 %v334
    %1266 = vmatpush1.msra.mxu0 %v333
    %1267 = vmatprep.subr.mxu0 0.0
    %1268 = vmatpush2.msra.mxu0 0.0
    %1269 = vmatprep.subr.mxu0 0.0
    %1270 = vmatpush2.msra.mxu0 0.0
    %1271 = vmatprep.subr.mxu0 0.0
    %1272 = vmatpush2.msra.mxu0 0.0
    %1273 = vmatprep.subr.mxu0 0.0
    %1274 = vmatpush2.msra.mxu0 0.0
    %1275 = vmatprep.subr.mxu0 0.0
    %1276 = vmatpush2.msra.mxu0 0.0
    %1277 = vmatprep.subr.mxu0 0.0
    %1278 = vmatpush2.msra.mxu0 0.0
    %1279 = vmatprep.subr.mxu0 0.0
    %1280 = vmatpush2.msra.mxu0 0.0
    %1281 = vmatprep.subr.mxu0 0.0
    %1282 = vmatpush2.msra.mxu0 0.0
    %1283 = vmatprep.subr.mxu0 0.0
    %1284 = vmatpush2.msra.mxu0 0.0
    %1285 = vmatprep.subr.mxu0 0.0
    %1286 = vmatpush2.msra.mxu0 0.0
    %1287 = vmatprep.subr.mxu0 0.0
    %1288 = vmatpush2.msra.mxu0 0.0
    %1289 = vmatprep.subr.mxu0 0.0
    %1290 = vmatpush2.msra.mxu0 0.0
    %1291 = vmatprep.subr.mxu0 0.0
    %1292 = vmatpush2.msra.mxu0 0.0
    %1293 = vmatprep.subr.mxu0 0.0
    %1294 = vmatpush2.msra.mxu0 0.0
    %1295 = vmatprep.subr.mxu0 0.0
    %1296 = vmatpush2.msra.mxu0 0.0
    %1297 = vmatprep.subr.mxu0 0.0
    %1298 = vmatpush2.msra.mxu0 0.0
    %1299 = vmatprep.mubr.f32.mxu0 0.0
    %1300 = vmatmul.mubr.f32.gmra.mxu0 %v1228
    %v1301 = vpop.f32.mrf.mxu0
    %v1302 = vadd.f32 0.0, %v1301
    %v1303 = vpop.f32.mrf.mxu0
    %v1304 = vadd.f32 0.0, %v1303
    %1305 = vdwg.mxu0
    %1306 = vmatprep.subr.mxu0 0.0
    %1307 = vmatpush1.msra.mxu0 %v380
    %1308 = vmatprep.subr.mxu0 0.0
    %1309 = vmatpush1.msra.mxu0 %v377
    %1310 = vmatprep.subr.mxu0 0.0
    %1311 = vmatpush1.msra.mxu0 %v374
    %1312 = vmatprep.subr.mxu0 0.0
    %1313 = vmatpush1.msra.mxu0 %v371
    %1314 = vmatprep.subr.mxu0 0.0
    %1315 = vmatpush1.msra.mxu0 %v368
    %1316 = vmatprep.subr.mxu0 0.0
    %1317 = vmatpush1.msra.mxu0 %v365
    %1318 = vmatprep.subr.mxu0 0.0
    %1319 = vmatpush1.msra.mxu0 %v362
    %1320 = vmatprep.subr.mxu0 0.0
    %1321 = vmatpush1.msra.mxu0 %v359
    %1322 = vmatprep.subr.mxu0 0.0
    %1323 = vmatpush1.msra.mxu0 %v356
    %1324 = vmatprep.subr.mxu0 0.0
    %1325 = vmatpush1.msra.mxu0 %v353
    %1326 = vmatprep.subr.mxu0 0.0
    %1327 = vmatpush1.msra.mxu0 %v350
    %1328 = vmatprep.subr.mxu0 0.0
    %1329 = vmatpush1.msra.mxu0 %v347
    %1330 = vmatprep.subr.mxu0 0.0
    %1331 = vmatpush1.msra.mxu0 %v344
    %1332 = vmatprep.subr.mxu0 0.0
    %1333 = vmatpush1.msra.mxu0 %v341
    %1334 = vmatprep.subr.mxu0 0.0
    %1335 = vmatpush1.msra.mxu0 %v338
    %1336 = vmatprep.subr.mxu0 0.0
    %1337 = vmatpush1.msra.mxu0 %v335
    %1338 = vmatprep.subr.mxu0 0.0
    %1339 = vmatpush2.msra.mxu0 0.0
    %1340 = vmatprep.subr.mxu0 0.0
    %1341 = vmatpush2.msra.mxu0 0.0
    %1342 = vmatprep.subr.mxu0 0.0
    %1343 = vmatpush2.msra.mxu0 0.0
    %1344 = vmatprep.subr.mxu0 0.0
    %1345 = vmatpush2.msra.mxu0 0.0
    %1346 = vmatprep.subr.mxu0 0.0
    %1347 = vmatpush2.msra.mxu0 0.0
    %1348 = vmatprep.subr.mxu0 0.0
    %1349 = vmatpush2.msra.mxu0 0.0
    %1350 = vmatprep.subr.mxu0 0.0
    %1351 = vmatpush2.msra.mxu0 0.0
    %1352 = vmatprep.subr.mxu0 0.0
    %1353 = vmatpush2.msra.mxu0 0.0
    %1354 = vmatprep.subr.mxu0 0.0
    %1355 = vmatpush2.msra.mxu0 0.0
    %1356 = vmatprep.subr.mxu0 0.0
    %1357 = vmatpush2.msra.mxu0 0.0
    %1358 = vmatprep.subr.mxu0 0.0
    %1359 = vmatpush2.msra.mxu0 0.0
    %1360 = vmatprep.subr.mxu0 0.0
    %1361 = vmatpush2.msra.mxu0 0.0
    %1362 = vmatprep.subr.mxu0 0.0
    %1363 = vmatpush2.msra.mxu0 0.0
    %1364 = vmatprep.subr.mxu0 0.0
    %1365 = vmatpush2.msra.mxu0 0.0
    %1366 = vmatprep.subr.mxu0 0.0
    %1367 = vmatpush2.msra.mxu0 0.0
    %1368 = vmatprep.subr.mxu0 0.0
    %1369 = vmatpush2.msra.mxu0 0.0
    %1370 = vmatprep.mubr.f32.mxu0 0.0
    %1371 = vmatmul.mubr.f32.gmra.mxu0 %v1228
    %v1372 = vpop.f32.mrf.mxu0
    %v1373 = vadd.f32 0.0, %v1372
    %v1374 = vpop.f32.mrf.mxu0
    %1375 = vdwg.mxu0
    %v1376 = vadd.f32 %v1232, %v1302
    %v1377 = vxor.u32 %v1376, 2147483648
    %v1378 = vmul.f32 %v1377, 1.442695
    %v1379 = vpow.pop %v1378
    %v1380 = vadd.f32 %v1379, 1.0
    %v1381 = vrcp.pop %v1380
    %v1382 = vmul.f32 1.0, %v1381
    %v1383 = vadd.f32 %v1233, %v1304
    %v1384 = vxor.u32 %v1383, 2147483648
    %v1385 = vmul.f32 %v1384, 1.442695
    %v1386 = vpow.pop %v1385
    %v1387 = vadd.f32 %v1386, 1.0
    %v1388 = vrcp.pop %v1387
    %v1389 = vmul.f32 1.0, %v1388
    %v1390 = vadd.f32 %v1373, %v386
    %v1391 = vmul.f32 %v1382, %v1390
    %v1392 = vadd.f32 %v1234, %v1391
    %v1393 = vtanh.pop %v1392
    %v1394 = vsub.f32 1.0, %v1389
    %v1395 = vmul.f32 %v1394, %v1393
    %v1396 = vmul.f32 %v1389, %v1228
    %v1397 = vadd.f32 %v1395, %v1396
    %s1398 = scalar_lea.vmem [#allocation6], 40
    %1399 = vst [vmem:[%s1398] sm:$0xff] %v1397
    %s1400 = scalar_lea.vmem [#allocation2], 144
    %v1401 = vld [vmem:[%s1400] sm:$0xff]
    %v1402 = vld [vmem:[%s1400 + $0x8] sm:$0xff]
    %v1403 = vld [vmem:[%s1400 + $0x10] sm:$0xff]
    %1404 = vmatprep.subr.mxu0 %v379
    %1405 = vmatpush1.msra.mxu0 %v378
    %1406 = vmatprep.subr.mxu0 %v376
    %1407 = vmatpush1.msra.mxu0 %v375
    %1408 = vmatprep.subr.mxu0 %v373
    %1409 = vmatpush1.msra.mxu0 %v372
    %1410 = vmatprep.subr.mxu0 %v370
    %1411 = vmatpush1.msra.mxu0 %v369
    %1412 = vmatprep.subr.mxu0 %v367
    %1413 = vmatpush1.msra.mxu0 %v366
    %1414 = vmatprep.subr.mxu0 %v364
    %1415 = vmatpush1.msra.mxu0 %v363
    %1416 = vmatprep.subr.mxu0 %v361
    %1417 = vmatpush1.msra.mxu0 %v360
    %1418 = vmatprep.subr.mxu0 %v358
    %1419 = vmatpush1.msra.mxu0 %v357
    %1420 = vmatprep.subr.mxu0 %v355
    %1421 = vmatpush1.msra.mxu0 %v354
    %1422 = vmatprep.subr.mxu0 %v352
    %1423 = vmatpush1.msra.mxu0 %v351
    %1424 = vmatprep.subr.mxu0 %v349
    %1425 = vmatpush1.msra.mxu0 %v348
    %1426 = vmatprep.subr.mxu0 %v346
    %1427 = vmatpush1.msra.mxu0 %v345
    %1428 = vmatprep.subr.mxu0 %v343
    %1429 = vmatpush1.msra.mxu0 %v342
    %1430 = vmatprep.subr.mxu0 %v340
    %1431 = vmatpush1.msra.mxu0 %v339
    %1432 = vmatprep.subr.mxu0 %v337
    %1433 = vmatpush1.msra.mxu0 %v336
    %1434 = vmatprep.subr.mxu0 %v334
    %1435 = vmatpush1.msra.mxu0 %v333
    %1436 = vmatprep.subr.mxu0 0.0
    %1437 = vmatpush2.msra.mxu0 0.0
    %1438 = vmatprep.subr.mxu0 0.0
    %1439 = vmatpush2.msra.mxu0 0.0
    %1440 = vmatprep.subr.mxu0 0.0
    %1441 = vmatpush2.msra.mxu0 0.0
    %1442 = vmatprep.subr.mxu0 0.0
    %1443 = vmatpush2.msra.mxu0 0.0
    %1444 = vmatprep.subr.mxu0 0.0
    %1445 = vmatpush2.msra.mxu0 0.0
    %1446 = vmatprep.subr.mxu0 0.0
    %1447 = vmatpush2.msra.mxu0 0.0
    %1448 = vmatprep.subr.mxu0 0.0
    %1449 = vmatpush2.msra.mxu0 0.0
    %1450 = vmatprep.subr.mxu0 0.0
    %1451 = vmatpush2.msra.mxu0 0.0
    %1452 = vmatprep.subr.mxu0 0.0
    %1453 = vmatpush2.msra.mxu0 0.0
    %1454 = vmatprep.subr.mxu0 0.0
    %1455 = vmatpush2.msra.mxu0 0.0
    %1456 = vmatprep.subr.mxu0 0.0
    %1457 = vmatpush2.msra.mxu0 0.0
    %1458 = vmatprep.subr.mxu0 0.0
    %1459 = vmatpush2.msra.mxu0 0.0
    %1460 = vmatprep.subr.mxu0 0.0
    %1461 = vmatpush2.msra.mxu0 0.0
    %1462 = vmatprep.subr.mxu0 0.0
    %1463 = vmatpush2.msra.mxu0 0.0
    %1464 = vmatprep.subr.mxu0 0.0
    %1465 = vmatpush2.msra.mxu0 0.0
    %1466 = vmatprep.subr.mxu0 0.0
    %1467 = vmatpush2.msra.mxu0 0.0
    %1468 = vmatprep.mubr.f32.mxu0 0.0
    %1469 = vmatmul.mubr.f32.gmra.mxu0 %v1397
    %v1470 = vpop.f32.mrf.mxu0
    %v1471 = vadd.f32 0.0, %v1470
    %v1472 = vpop.f32.mrf.mxu0
    %v1473 = vadd.f32 0.0, %v1472
    %1474 = vdwg.mxu0
    %1475 = vmatprep.subr.mxu0 0.0
    %1476 = vmatpush1.msra.mxu0 %v380
    %1477 = vmatprep.subr.mxu0 0.0
    %1478 = vmatpush1.msra.mxu0 %v377
    %1479 = vmatprep.subr.mxu0 0.0
    %1480 = vmatpush1.msra.mxu0 %v374
    %1481 = vmatprep.subr.mxu0 0.0
    %1482 = vmatpush1.msra.mxu0 %v371
    %1483 = vmatprep.subr.mxu0 0.0
    %1484 = vmatpush1.msra.mxu0 %v368
    %1485 = vmatprep.subr.mxu0 0.0
    %1486 = vmatpush1.msra.mxu0 %v365
    %1487 = vmatprep.subr.mxu0 0.0
    %1488 = vmatpush1.msra.mxu0 %v362
    %1489 = vmatprep.subr.mxu0 0.0
    %1490 = vmatpush1.msra.mxu0 %v359
    %1491 = vmatprep.subr.mxu0 0.0
    %1492 = vmatpush1.msra.mxu0 %v356
    %1493 = vmatprep.subr.mxu0 0.0
    %1494 = vmatpush1.msra.mxu0 %v353
    %1495 = vmatprep.subr.mxu0 0.0
    %1496 = vmatpush1.msra.mxu0 %v350
    %1497 = vmatprep.subr.mxu0 0.0
    %1498 = vmatpush1.msra.mxu0 %v347
    %1499 = vmatprep.subr.mxu0 0.0
    %1500 = vmatpush1.msra.mxu0 %v344
    %1501 = vmatprep.subr.mxu0 0.0
    %1502 = vmatpush1.msra.mxu0 %v341
    %1503 = vmatprep.subr.mxu0 0.0
    %1504 = vmatpush1.msra.mxu0 %v338
    %1505 = vmatprep.subr.mxu0 0.0
    %1506 = vmatpush1.msra.mxu0 %v335
    %1507 = vmatprep.subr.mxu0 0.0
    %1508 = vmatpush2.msra.mxu0 0.0
    %1509 = vmatprep.subr.mxu0 0.0
    %1510 = vmatpush2.msra.mxu0 0.0
    %1511 = vmatprep.subr.mxu0 0.0
    %1512 = vmatpush2.msra.mxu0 0.0
    %1513 = vmatprep.subr.mxu0 0.0
    %1514 = vmatpush2.msra.mxu0 0.0
    %1515 = vmatprep.subr.mxu0 0.0
    %1516 = vmatpush2.msra.mxu0 0.0
    %1517 = vmatprep.subr.mxu0 0.0
    %1518 = vmatpush2.msra.mxu0 0.0
    %1519 = vmatprep.subr.mxu0 0.0
    %1520 = vmatpush2.msra.mxu0 0.0
    %1521 = vmatprep.subr.mxu0 0.0
    %1522 = vmatpush2.msra.mxu0 0.0
    %1523 = vmatprep.subr.mxu0 0.0
    %1524 = vmatpush2.msra.mxu0 0.0
    %1525 = vmatprep.subr.mxu0 0.0
    %1526 = vmatpush2.msra.mxu0 0.0
    %1527 = vmatprep.subr.mxu0 0.0
    %1528 = vmatpush2.msra.mxu0 0.0
    %1529 = vmatprep.subr.mxu0 0.0
    %1530 = vmatpush2.msra.mxu0 0.0
    %1531 = vmatprep.subr.mxu0 0.0
    %1532 = vmatpush2.msra.mxu0 0.0
    %1533 = vmatprep.subr.mxu0 0.0
    %1534 = vmatpush2.msra.mxu0 0.0
    %1535 = vmatprep.subr.mxu0 0.0
    %1536 = vmatpush2.msra.mxu0 0.0
    %1537 = vmatprep.subr.mxu0 0.0
    %1538 = vmatpush2.msra.mxu0 0.0
    %1539 = vmatprep.mubr.f32.mxu0 0.0
    %1540 = vmatmul.mubr.f32.gmra.mxu0 %v1397
    %v1541 = vpop.f32.mrf.mxu0
    %v1542 = vadd.f32 0.0, %v1541
    %v1543 = vpop.f32.mrf.mxu0
    %1544 = vdwg.mxu0
    %v1545 = vadd.f32 %v1401, %v1471
    %v1546 = vxor.u32 %v1545, 2147483648
    %v1547 = vmul.f32 %v1546, 1.442695
    %v1548 = vpow.pop %v1547
    %v1549 = vadd.f32 %v1548, 1.0
    %v1550 = vrcp.pop %v1549
    %v1551 = vmul.f32 1.0, %v1550
    %v1552 = vadd.f32 %v1402, %v1473
    %v1553 = vxor.u32 %v1552, 2147483648
    %v1554 = vmul.f32 %v1553, 1.442695
    %v1555 = vpow.pop %v1554
    %v1556 = vadd.f32 %v1555, 1.0
    %v1557 = vrcp.pop %v1556
    %v1558 = vmul.f32 1.0, %v1557
    %v1559 = vadd.f32 %v1542, %v386
    %v1560 = vmul.f32 %v1551, %v1559
    %v1561 = vadd.f32 %v1403, %v1560
    %v1562 = vtanh.pop %v1561
    %v1563 = vsub.f32 1.0, %v1558
    %v1564 = vmul.f32 %v1563, %v1562
    %v1565 = vmul.f32 %v1558, %v1397
    %v1566 = vadd.f32 %v1564, %v1565
    %s1567 = scalar_lea.vmem [#allocation6], 48
    %1568 = vst [vmem:[%s1567] sm:$0xff] %v1566
    %s1569 = scalar_lea.vmem [#allocation2], 168
    %v1570 = vld [vmem:[%s1569] sm:$0xff]
    %v1571 = vld [vmem:[%s1569 + $0x8] sm:$0xff]
    %v1572 = vld [vmem:[%s1569 + $0x10] sm:$0xff]
    %1573 = vmatprep.subr.mxu0 %v379
    %1574 = vmatpush1.msra.mxu0 %v378
    %1575 = vmatprep.subr.mxu0 %v376
    %1576 = vmatpush1.msra.mxu0 %v375
    %1577 = vmatprep.subr.mxu0 %v373
    %1578 = vmatpush1.msra.mxu0 %v372
    %1579 = vmatprep.subr.mxu0 %v370
    %1580 = vmatpush1.msra.mxu0 %v369
    %1581 = vmatprep.subr.mxu0 %v367
    %1582 = vmatpush1.msra.mxu0 %v366
    %1583 = vmatprep.subr.mxu0 %v364
    %1584 = vmatpush1.msra.mxu0 %v363
    %1585 = vmatprep.subr.mxu0 %v361
    %1586 = vmatpush1.msra.mxu0 %v360
    %1587 = vmatprep.subr.mxu0 %v358
    %1588 = vmatpush1.msra.mxu0 %v357
    %1589 = vmatprep.subr.mxu0 %v355
    %1590 = vmatpush1.msra.mxu0 %v354
    %1591 = vmatprep.subr.mxu0 %v352
    %1592 = vmatpush1.msra.mxu0 %v351
    %1593 = vmatprep.subr.mxu0 %v349
    %1594 = vmatpush1.msra.mxu0 %v348
    %1595 = vmatprep.subr.mxu0 %v346
    %1596 = vmatpush1.msra.mxu0 %v345
    %1597 = vmatprep.subr.mxu0 %v343
    %1598 = vmatpush1.msra.mxu0 %v342
    %1599 = vmatprep.subr.mxu0 %v340
    %1600 = vmatpush1.msra.mxu0 %v339
    %1601 = vmatprep.subr.mxu0 %v337
    %1602 = vmatpush1.msra.mxu0 %v336
    %1603 = vmatprep.subr.mxu0 %v334
    %1604 = vmatpush1.msra.mxu0 %v333
    %1605 = vmatprep.subr.mxu0 0.0
    %1606 = vmatpush2.msra.mxu0 0.0
    %1607 = vmatprep.subr.mxu0 0.0
    %1608 = vmatpush2.msra.mxu0 0.0
    %1609 = vmatprep.subr.mxu0 0.0
    %1610 = vmatpush2.msra.mxu0 0.0
    %1611 = vmatprep.subr.mxu0 0.0
    %1612 = vmatpush2.msra.mxu0 0.0
    %1613 = vmatprep.subr.mxu0 0.0
    %1614 = vmatpush2.msra.mxu0 0.0
    %1615 = vmatprep.subr.mxu0 0.0
    %1616 = vmatpush2.msra.mxu0 0.0
    %1617 = vmatprep.subr.mxu0 0.0
    %1618 = vmatpush2.msra.mxu0 0.0
    %1619 = vmatprep.subr.mxu0 0.0
    %1620 = vmatpush2.msra.mxu0 0.0
    %1621 = vmatprep.subr.mxu0 0.0
    %1622 = vmatpush2.msra.mxu0 0.0
    %1623 = vmatprep.subr.mxu0 0.0
    %1624 = vmatpush2.msra.mxu0 0.0
    %1625 = vmatprep.subr.mxu0 0.0
    %1626 = vmatpush2.msra.mxu0 0.0
    %1627 = vmatprep.subr.mxu0 0.0
    %1628 = vmatpush2.msra.mxu0 0.0
    %1629 = vmatprep.subr.mxu0 0.0
    %1630 = vmatpush2.msra.mxu0 0.0
    %1631 = vmatprep.subr.mxu0 0.0
    %1632 = vmatpush2.msra.mxu0 0.0
    %1633 = vmatprep.subr.mxu0 0.0
    %1634 = vmatpush2.msra.mxu0 0.0
    %1635 = vmatprep.subr.mxu0 0.0
    %1636 = vmatpush2.msra.mxu0 0.0
    %1637 = vmatprep.mubr.f32.mxu0 0.0
    %1638 = vmatmul.mubr.f32.gmra.mxu0 %v1566
    %v1639 = vpop.f32.mrf.mxu0
    %v1640 = vadd.f32 0.0, %v1639
    %v1641 = vpop.f32.mrf.mxu0
    %v1642 = vadd.f32 0.0, %v1641
    %1643 = vdwg.mxu0
    %1644 = vmatprep.subr.mxu0 0.0
    %1645 = vmatpush1.msra.mxu0 %v380
    %1646 = vmatprep.subr.mxu0 0.0
    %1647 = vmatpush1.msra.mxu0 %v377
    %1648 = vmatprep.subr.mxu0 0.0
    %1649 = vmatpush1.msra.mxu0 %v374
    %1650 = vmatprep.subr.mxu0 0.0
    %1651 = vmatpush1.msra.mxu0 %v371
    %1652 = vmatprep.subr.mxu0 0.0
    %1653 = vmatpush1.msra.mxu0 %v368
    %1654 = vmatprep.subr.mxu0 0.0
    %1655 = vmatpush1.msra.mxu0 %v365
    %1656 = vmatprep.subr.mxu0 0.0
    %1657 = vmatpush1.msra.mxu0 %v362
    %1658 = vmatprep.subr.mxu0 0.0
    %1659 = vmatpush1.msra.mxu0 %v359
    %1660 = vmatprep.subr.mxu0 0.0
    %1661 = vmatpush1.msra.mxu0 %v356
    %1662 = vmatprep.subr.mxu0 0.0
    %1663 = vmatpush1.msra.mxu0 %v353
    %1664 = vmatprep.subr.mxu0 0.0
    %1665 = vmatpush1.msra.mxu0 %v350
    %1666 = vmatprep.subr.mxu0 0.0
    %1667 = vmatpush1.msra.mxu0 %v347
    %1668 = vmatprep.subr.mxu0 0.0
    %1669 = vmatpush1.msra.mxu0 %v344
    %1670 = vmatprep.subr.mxu0 0.0
    %1671 = vmatpush1.msra.mxu0 %v341
    %1672 = vmatprep.subr.mxu0 0.0
    %1673 = vmatpush1.msra.mxu0 %v338
    %1674 = vmatprep.subr.mxu0 0.0
    %1675 = vmatpush1.msra.mxu0 %v335
    %1676 = vmatprep.subr.mxu0 0.0
    %1677 = vmatpush2.msra.mxu0 0.0
    %1678 = vmatprep.subr.mxu0 0.0
    %1679 = vmatpush2.msra.mxu0 0.0
    %1680 = vmatprep.subr.mxu0 0.0
    %1681 = vmatpush2.msra.mxu0 0.0
    %1682 = vmatprep.subr.mxu0 0.0
    %1683 = vmatpush2.msra.mxu0 0.0
    %1684 = vmatprep.subr.mxu0 0.0
    %1685 = vmatpush2.msra.mxu0 0.0
    %1686 = vmatprep.subr.mxu0 0.0
    %1687 = vmatpush2.msra.mxu0 0.0
    %1688 = vmatprep.subr.mxu0 0.0
    %1689 = vmatpush2.msra.mxu0 0.0
    %1690 = vmatprep.subr.mxu0 0.0
    %1691 = vmatpush2.msra.mxu0 0.0
    %1692 = vmatprep.subr.mxu0 0.0
    %1693 = vmatpush2.msra.mxu0 0.0
    %1694 = vmatprep.subr.mxu0 0.0
    %1695 = vmatpush2.msra.mxu0 0.0
    %1696 = vmatprep.subr.mxu0 0.0
    %1697 = vmatpush2.msra.mxu0 0.0
    %1698 = vmatprep.subr.mxu0 0.0
    %1699 = vmatpush2.msra.mxu0 0.0
    %1700 = vmatprep.subr.mxu0 0.0
    %1701 = vmatpush2.msra.mxu0 0.0
    %1702 = vmatprep.subr.mxu0 0.0
    %1703 = vmatpush2.msra.mxu0 0.0
    %1704 = vmatprep.subr.mxu0 0.0
    %1705 = vmatpush2.msra.mxu0 0.0
    %1706 = vmatprep.subr.mxu0 0.0
    %1707 = vmatpush2.msra.mxu0 0.0
    %1708 = vmatprep.mubr.f32.mxu0 0.0
    %1709 = vmatmul.mubr.f32.gmra.mxu0 %v1566
    %v1710 = vpop.f32.mrf.mxu0
    %v1711 = vadd.f32 0.0, %v1710
    %v1712 = vpop.f32.mrf.mxu0
    %1713 = vdwg.mxu0
    %v1714 = vadd.f32 %v1570, %v1640
    %v1715 = vxor.u32 %v1714, 2147483648
    %v1716 = vmul.f32 %v1715, 1.442695
    %v1717 = vpow.pop %v1716
    %v1718 = vadd.f32 %v1717, 1.0
    %v1719 = vrcp.pop %v1718
    %v1720 = vmul.f32 1.0, %v1719
    %v1721 = vadd.f32 %v1571, %v1642
    %v1722 = vxor.u32 %v1721, 2147483648
    %v1723 = vmul.f32 %v1722, 1.442695
    %v1724 = vpow.pop %v1723
    %v1725 = vadd.f32 %v1724, 1.0
    %v1726 = vrcp.pop %v1725
    %v1727 = vmul.f32 1.0, %v1726
    %v1728 = vadd.f32 %v1711, %v386
    %v1729 = vmul.f32 %v1720, %v1728
    %v1730 = vadd.f32 %v1572, %v1729
    %v1731 = vtanh.pop %v1730
    %v1732 = vsub.f32 1.0, %v1727
    %v1733 = vmul.f32 %v1732, %v1731
    %v1734 = vmul.f32 %v1727, %v1566
    %v1735 = vadd.f32 %v1733, %v1734
    %s1736 = scalar_lea.vmem [#allocation6], 56
    %1737 = vst [vmem:[%s1736] sm:$0xff] %v1735
    // Predicated region
    $region26: #{tpu_custom_call.1} parent=1 // pred_check
      _
    $region27: #{tpu_custom_call.1} parent=1 // pred_check_branch
      %1739 = sbr.rel (0) target = $region29
    $region28: #{tpu_custom_call.1} parent=1 // pred_region
      %s1741 = ssub.s32 1024, 1024
      %1742 = vsyncadd [#allocation5], %s1741
      %s1743 = sshll.u32 [#allocation6], 4
      %s1744 = int_to_ptr.vmem [resolvable:$true] %s1743
      %1749 = dma.vmem_to_hbm [thread:$0]  %s1744, 1024, %s5, [#allocation5], 128, 128, 8
    $region29: #{tpu_custom_call.1} parent=1 // pred_fallthru
      _
    // Predicated region
    $region30: #{tpu_custom_call.1} parent=1 // pred_check
      _
    $region31: #{tpu_custom_call.1} parent=1 // pred_check_branch
      %1751 = sbr.rel (0) target = $region33
    $region32: #{tpu_custom_call.1} parent=1 // pred_region
      %1752 = dma.done [#allocation5], 1024
    $region33: #{tpu_custom_call.1} parent=1 // pred_fallthru
      _
    %1753 = vsyncpa [#allocation4], 1
    %1754 = vsyncpa [#allocation5], 1

</llo_original>
